<compile_context>
chip_gen: v7x
topology: tpu7x:2x2x1
jax: 0.10.0
libtpu: 0.0.40
codegen_flags: <defaults>
</compile_context>

<pallas_src>
import functools

import jax
import jax.numpy as jnp
from jax.experimental import pallas as pl
from jax.experimental.pallas import tpu as pltpu


def _round_up(x: int, m: int) -> int:
    return (x + m - 1) // m * m


# ----------------------------------------------------------------------------
# Encoder kernel: fused 1x1-conv (MXU matmul) + ReLU + global-avg-pool + linear
# ----------------------------------------------------------------------------
def _encoder_kernel(x_ref, w1_ref, b1_ref, w2_ref, b2_ref, o_ref, acc_ref,
                    *, hw_total, tile_hw):
    s = pl.program_id(1)

    @pl.when(s == 0)
    def _init():
        acc_ref[...] = jnp.zeros_like(acc_ref)

    x = x_ref[0]                                                  # [tile_hw, Cp] bf16
    y = jnp.dot(x, w1_ref[...], preferred_element_type=jnp.float32)  # MXU, f32 acc
    y = jnp.maximum(y + b1_ref[...], 0.0)                         # bias + ReLU (VPU)

    # Mask spatial padding rows so they do not pollute the pooled sum.
    row = s * tile_hw + jax.lax.broadcasted_iota(jnp.int32, y.shape, 0)
    y = jnp.where(row < hw_total, y, 0.0)

    acc_ref[...] += jnp.sum(y, axis=0, keepdims=True)             # [1, Dp] running sum

    @pl.when(s == pl.num_programs(1) - 1)
    def _finalize():
        pooled = acc_ref[...] * (1.0 / float(hw_total))           # [1, Dp] f32
        code = jnp.dot(pooled.astype(w2_ref.dtype), w2_ref[...],
                       preferred_element_type=jnp.float32) + b2_ref[...]
        o_ref[0] = code.astype(o_ref.dtype)


def fri_encoder(x_flat, w1, b1, w2, b2, *, tile_hw=512):
    """x_flat: [B, H*W, C] (NHWC flattened in the wrapper). Returns [B, D] f32."""
    B, HW, C = x_flat.shape
    D = w1.shape[1]
    Cp = _round_up(C, 128)
    Dp = _round_up(D, 128)
    tile_hw = min(tile_hw, _round_up(HW, 16))
    HWp = _round_up(HW, tile_hw)

    # bf16 inputs / weights, f32 accumulation (halves HBM/VMEM traffic, 2x MXU).
    xb = jnp.zeros((B, HWp, Cp), jnp.bfloat16).at[:, :HW, :C].set(
        x_flat.astype(jnp.bfloat16))
    w1p = jnp.zeros((Cp, Dp), jnp.bfloat16).at[:C, :D].set(w1.astype(jnp.bfloat16))
    b1p = jnp.zeros((1, Dp), jnp.float32).at[0, :D].set(b1)
    w2p = jnp.zeros((Dp, Dp), jnp.bfloat16).at[:D, :D].set(w2.astype(jnp.bfloat16))
    b2p = jnp.zeros((1, Dp), jnp.float32).at[0, :D].set(b2)

    grid = (B, HWp // tile_hw)
    kernel = functools.partial(_encoder_kernel, hw_total=HW, tile_hw=tile_hw)

    codes = pl.pallas_call(
        kernel,
        out_shape=jax.ShapeDtypeStruct((B, 1, Dp), jnp.float32),
        grid_spec=pltpu.PrefetchScalarGridSpec(
            num_scalar_prefetch=0,
            grid=grid,
            in_specs=[
                pl.BlockSpec((1, tile_hw, Cp), lambda b, s: (b, s, 0)),
                pl.BlockSpec((Cp, Dp), lambda b, s: (0, 0)),   # resident weights
                pl.BlockSpec((1, Dp), lambda b, s: (0, 0)),
                pl.BlockSpec((Dp, Dp), lambda b, s: (0, 0)),
                pl.BlockSpec((1, Dp), lambda b, s: (0, 0)),
            ],
            out_specs=pl.BlockSpec((1, 1, Dp), lambda b, s: (b, 0, 0)),
            scratch_shapes=[pltpu.VMEM((1, Dp), jnp.float32)],
        ),
        compiler_params=pltpu.CompilerParams(
            dimension_semantics=("parallel", "arbitrary")),
    )(xb, w1p, b1p, w2p, b2p)
    return codes[:, 0, :D]


# ----------------------------------------------------------------------------
# Decoder kernel: query-vs-line evaluation (pure VPU) + min + sigmoid epilogue
# ----------------------------------------------------------------------------
def _decoder_kernel(q_ref, a_ref, b_ref, c_ref, o_ref):
    q = q_ref[0]                         # [tile_q, 2] f32
    x = q[:, 0:1]                        # [tile_q, 1]
    y = q[:, 1:2]
    a = a_ref[0]                         # [1, Lp]  (lines on the lane axis)
    bl = b_ref[0]
    c = c_ref[0]
    d = x * a + y * bl + c               # [tile_q, Lp]  -- VPU only, no MXU
    m = jnp.min(d, axis=-1, keepdims=True)      # one cross-lane (XLU) reduce per tile
    # sigmoid on the [tile_q, 1] min only: EUP exp + approx reciprocal
    o_ref[0] = pl.reciprocal(1.0 + jnp.exp(-m), approx=True)


def fri_decoder(line_param, queries, *, tile_q=256):
    """line_param: [B, L, 3] f32 (a, b, c). queries: [B, Q, 2]. Returns [B, Q] f32."""
    B, L, _ = line_param.shape
    _, Q, _ = queries.shape
    Lp = _round_up(L, 128)
    tile_q = min(tile_q, _round_up(Q, 8))
    Qp = _round_up(Q, tile_q)

    a = jnp.zeros((B, 1, Lp), jnp.float32).at[:, 0, :L].set(line_param[:, :, 0])
    b = jnp.zeros((B, 1, Lp), jnp.float32).at[:, 0, :L].set(line_param[:, :, 1])
    # Padded lines get a huge intercept so they never win the min reduction.
    c = jnp.full((B, 1, Lp), 1e30, jnp.float32).at[:, 0, :L].set(line_param[:, :, 2])

    qp = jnp.zeros((B, Qp, 2), jnp.float32).at[:, :Q, :].set(
        queries.astype(jnp.float32))

    grid = (B, Qp // tile_q)
    occ = pl.pallas_call(
        _decoder_kernel,
        out_shape=jax.ShapeDtypeStruct((B, Qp, 1), jnp.float32),
        grid_spec=pltpu.PrefetchScalarGridSpec(
            num_scalar_prefetch=0,
            grid=grid,
            in_specs=[
                pl.BlockSpec((1, tile_q, 2), lambda bi, qi: (bi, qi, 0)),
                pl.BlockSpec((1, 1, Lp), lambda bi, qi: (bi, 0, 0)),  # resident params
                pl.BlockSpec((1, 1, Lp), lambda bi, qi: (bi, 0, 0)),
                pl.BlockSpec((1, 1, Lp), lambda bi, qi: (bi, 0, 0)),
            ],
            out_specs=pl.BlockSpec((1, tile_q, 1), lambda bi, qi: (bi, qi, 0)),
        ),
        compiler_params=pltpu.CompilerParams(
            dimension_semantics=("parallel", "arbitrary")),
    )(qp, a, b, c)
    return occ[:, :Q, 0]


# ----------------------------------------------------------------------------
# FRINet forward
# ----------------------------------------------------------------------------
class FRINetPallas:
    """Pallas-TPU forward pass for FRINet (phase == 0)."""

    def __init__(self, key, *, in_channels, feat_dim,
                 num_horizontal_line, num_vertical_line,
                 num_diagonal_line=0, phase=0):
        self.phase = phase
        if phase == 0:
            self.num_line = num_horizontal_line + num_vertical_line
        else:
            self.num_line = (num_horizontal_line + num_vertical_line
                             + num_diagonal_line)
        D = feat_dim
        k1, k2, k3, k4, k5, k6 = jax.random.split(key, 6)
        self.w1 = 0.1 * jax.random.normal(k1, (in_channels, D), jnp.float32)
        self.b1 = 0.01 * jax.random.normal(k2, (D,), jnp.float32)
        self.w2 = 0.1 * jax.random.normal(k3, (D, D), jnp.float32)
        self.b2 = 0.01 * jax.random.normal(k4, (D,), jnp.float32)
        self.w_line = 0.1 * jax.random.normal(k5, (D, 3 * self.num_line), jnp.float32)
        self.b_line = 0.01 * jax.random.normal(k6, (3 * self.num_line,), jnp.float32)

    def __call__(self, samples, queries):
        # samples: [B, C, H, W] (PyTorch NCHW).  Layout change is done by XLA
        # in the wrapper (never inside the kernel): NCHW -> NHWC -> [B, HW, C].
        B, C, H, W = samples.shape
        x_flat = jnp.transpose(samples, (0, 2, 3, 1)).reshape(B, H * W, C)

        room_codes = fri_encoder(x_flat, self.w1, self.b1, self.w2, self.b2)

        # Tiny line-parameter head: O(B*D*3L) FLOPs -> left to XLA (no extra
        # pallas_call launch / HBM round-trip worth fusing for).
        line_param = (room_codes @ self.w_line + self.b_line).reshape(
            B, self.num_line, 3)

        occupancy = fri_decoder(line_param, queries)
        return line_param, occupancy


if __name__ == "__main__":
    key = jax.random.PRNGKey(0)
    k_param, k_img, k_qry = jax.random.split(key, 3)

    B, C, H, W = 2, 4, 16, 16
    feat_dim = 32
    num_h, num_v = 8, 8          # phase == 0 -> num_line = 16
    Q = 64

    net = FRINetPallas(k_param, in_channels=C, feat_dim=feat_dim,
                       num_horizontal_line=num_h, num_vertical_line=num_v,
                       phase=0)

    samples = jax.random.normal(k_img, (B, C, H, W), jnp.float32)
    queries = jax.random.uniform(k_qry, (B, Q, 2), jnp.float32)

    line_param, occupancy = jax.jit(net.__call__)(samples, queries)
    jax.block_until_ready((line_param, occupancy))
    print("KERNEL_OK")
</pallas_src>

<mosaic_0001>
module attributes {stable_mosaic.version = 11 : i64} {
  func.func @_encoder_kernel(%arg0: i32, %arg1: i32, %arg2: memref<1x256x128xbf16, #tpu.memory_space<vmem>>, %arg3: memref<128x128xbf16, #tpu.memory_space<vmem>>, %arg4: memref<1x128xf32, #tpu.memory_space<vmem>>, %arg5: memref<128x128xbf16, #tpu.memory_space<vmem>>, %arg6: memref<1x128xf32, #tpu.memory_space<vmem>>, %arg7: memref<1x1x128xf32, #tpu.memory_space<vmem>>, %arg8: memref<1x128xf32, #tpu.memory_space<vmem>>) attributes {dimension_semantics = [#tpu.dimension_semantics<parallel>, #tpu.dimension_semantics<arbitrary>], iteration_bounds = array<i64: 2, 1>, scalar_prefetch = 0 : i64, scratch_operands = 1 : i64, tpu.core_type = #tpu.core_type<tc>, window_params = [{transform_indices = @transform_0, window_bounds = array<i64: 1, 256, 128>}, {pipeline_mode = #tpu.pipeline_mode<synchronous>, transform_indices = @transform_1, window_bounds = array<i64: 128, 128>}, {pipeline_mode = #tpu.pipeline_mode<synchronous>, transform_indices = @transform_2, window_bounds = array<i64: 1, 128>}, {pipeline_mode = #tpu.pipeline_mode<synchronous>, transform_indices = @transform_3, window_bounds = array<i64: 128, 128>}, {pipeline_mode = #tpu.pipeline_mode<synchronous>, transform_indices = @transform_4, window_bounds = array<i64: 1, 128>}, {transform_indices = @transform_5, window_bounds = array<i64: 1, 1, 128>}]} {
    %c0_i32 = arith.constant 0 : i32
    %0 = arith.cmpi eq, %arg1, %c0_i32 : i32
    %1 = arith.extui %0 : i1 to i32
    %c0_i32_0 = arith.constant 0 : i32
    %2 = arith.cmpi ne, %1, %c0_i32_0 : i32
    scf.if %2 {
      %cst_17 = arith.constant 0.000000e+00 : f32
      %28 = vector.broadcast %cst_17 : f32 to vector<1x128xf32>
      %c0_18 = arith.constant 0 : index
      %c0_19 = arith.constant 0 : index
      %29 = vector.load %arg8[%c0_18, %c0_19] : memref<1x128xf32, #tpu.memory_space<vmem>>, vector<1x128xf32>
      tpu.vector_store %arg8[%c0_18, %c0_19], %28 {strides = array<i32>} : memref<1x128xf32, #tpu.memory_space<vmem>>, vector<1x128xf32>,
    } else {
    }
    %c0 = arith.constant 0 : index
    %c0_1 = arith.constant 0 : index
    %c0_2 = arith.constant 0 : index
    %3 = vector.load %arg2[%c0, %c0_1, %c0_2] : memref<1x256x128xbf16, #tpu.memory_space<vmem>>, vector<1x256x128xbf16>
    %4 = vector.shape_cast %3 : vector<1x256x128xbf16> to vector<256x128xbf16>
    %c0_3 = arith.constant 0 : index
    %c0_4 = arith.constant 0 : index
    %5 = vector.load %arg3[%c0_3, %c0_4] : memref<128x128xbf16, #tpu.memory_space<vmem>>, vector<128x128xbf16>
    %cst = arith.constant dense<0.000000e+00> : vector<256x128xf32>
    %6 = tpu.matmul %4, %5, %cst {dimension_numbers = #tpu.dot_dimension_numbers<[1], [0], [0], [1], [0, 0, 1, 1], [], []>} : vector<256x128xbf16>, vector<128x128xbf16>, vector<256x128xf32> -> vector<256x128xf32>
    %c0_5 = arith.constant 0 : index
    %c0_6 = arith.constant 0 : index
    %7 = vector.load %arg4[%c0_5, %c0_6] : memref<1x128xf32, #tpu.memory_space<vmem>>, vector<1x128xf32>
    %8 = vector.broadcast %7 : vector<1x128xf32> to vector<256x128xf32>
    %9 = arith.addf %6, %8 : vector<256x128xf32>
    %cst_7 = arith.constant 0.000000e+00 : f32
    %10 = vector.broadcast %cst_7 : f32 to vector<256x128xf32>
    %11 = arith.maximumf %9, %10 : vector<256x128xf32>
    %c256_i32 = arith.constant 256 : i32
    %12 = arith.muli %arg1, %c256_i32 : i32
    %13 = tpu.iota {dimensions = array<i32: 0>} : vector<256x128xi32>
    %14 = vector.broadcast %12 : i32 to vector<256x128xi32>
    %15 = arith.addi %14, %13 : vector<256x128xi32>
    %c256_i32_8 = arith.constant 256 : i32
    %16 = vector.broadcast %c256_i32_8 : i32 to vector<256x128xi32>
    %17 = arith.cmpi slt, %15, %16 : vector<256x128xi32>
    %cst_9 = arith.constant 0.000000e+00 : f32
    %18 = vector.broadcast %cst_9 : f32 to vector<256x128xf32>
    %19 = arith.select %17, %11, %18 : vector<256x128xi1>, vector<256x128xf32>
    %c0_10 = arith.constant 0 : index
    %c0_11 = arith.constant 0 : index
    %20 = vector.load %arg8[%c0_10, %c0_11] : memref<1x128xf32, #tpu.memory_space<vmem>>, vector<1x128xf32>
    %cst_12 = arith.constant dense<0.000000e+00> : vector<128xf32>
    %21 = vector.multi_reduction <add>, %19, %cst_12 [0] : vector<256x128xf32> to vector<128xf32>
    %22 = vector.shape_cast %21 : vector<128xf32> to vector<1x128xf32>
    %23 = arith.addf %20, %22 : vector<1x128xf32>
    %c0_13 = arith.constant 0 : index
    %c0_14 = arith.constant 0 : index
    %24 = vector.load %arg8[%c0_13, %c0_14] : memref<1x128xf32, #tpu.memory_space<vmem>>, vector<1x128xf32>
    tpu.vector_store %arg8[%c0_13, %c0_14], %23 {strides = array<i32>} : memref<1x128xf32, #tpu.memory_space<vmem>>, vector<1x128xf32>,
    %c0_i32_15 = arith.constant 0 : i32
    %25 = arith.cmpi eq, %arg1, %c0_i32_15 : i32
    %26 = arith.extui %25 : i1 to i32
    %c0_i32_16 = arith.constant 0 : i32
    %27 = arith.cmpi ne, %26, %c0_i32_16 : i32
    scf.if %27 {
      %c0_17 = arith.constant 0 : index
      %c0_18 = arith.constant 0 : index
      %28 = vector.load %arg8[%c0_17, %c0_18] : memref<1x128xf32, #tpu.memory_space<vmem>>, vector<1x128xf32>
      %cst_19 = arith.constant 3.906250e-03 : f32
      %29 = vector.broadcast %cst_19 : f32 to vector<1x128xf32>
      %30 = arith.mulf %28, %29 : vector<1x128xf32>
      %31 = arith.truncf %30 : vector<1x128xf32> to vector<1x128xbf16>
      %c0_20 = arith.constant 0 : index
      %c0_21 = arith.constant 0 : index
      %32 = vector.load %arg5[%c0_20, %c0_21] : memref<128x128xbf16, #tpu.memory_space<vmem>>, vector<128x128xbf16>
      %cst_22 = arith.constant dense<0.000000e+00> : vector<1x128xf32>
      %33 = tpu.matmul %31, %32, %cst_22 {dimension_numbers = #tpu.dot_dimension_numbers<[1], [0], [0], [1], [0, 0, 1, 1], [], []>} : vector<1x128xbf16>, vector<128x128xbf16>, vector<1x128xf32> -> vector<1x128xf32>
      %c0_23 = arith.constant 0 : index
      %c0_24 = arith.constant 0 : index
      %34 = vector.load %arg6[%c0_23, %c0_24] : memref<1x128xf32, #tpu.memory_space<vmem>>, vector<1x128xf32>
      %35 = arith.addf %33, %34 : vector<1x128xf32>
      %c0_25 = arith.constant 0 : index
      %c0_26 = arith.constant 0 : index
      %c0_27 = arith.constant 0 : index
      %36 = vector.load %arg7[%c0_25, %c0_26, %c0_27] : memref<1x1x128xf32, #tpu.memory_space<vmem>>, vector<1x1x128xf32>
      %37 = vector.shape_cast %36 : vector<1x1x128xf32> to vector<1x128xf32>
      %38 = vector.shape_cast %35 : vector<1x128xf32> to vector<1x1x128xf32>
      tpu.vector_store %arg7[%c0_25, %c0_26, %c0_27], %38 {strides = array<i32>} : memref<1x1x128xf32, #tpu.memory_space<vmem>>, vector<1x1x128xf32>,
    } else {
    }
    return
  }
  func.func @transform_0(%arg0: i32, %arg1: i32) -> (i32, i32, i32) {
    %c0_i32 = arith.constant 0 : i32
    %c0_i32_0 = arith.constant 0 : i32
    return %arg0, %arg1, %c0_i32 : i32, i32, i32
  }
  func.func @transform_1(%arg0: i32, %arg1: i32) -> (i32, i32) {
    %c0_i32 = arith.constant 0 : i32
    %c0_i32_0 = arith.constant 0 : i32
    %c0_i32_1 = arith.constant 0 : i32
    return %c0_i32, %c0_i32_0 : i32, i32
  }
  func.func @transform_2(%arg0: i32, %arg1: i32) -> (i32, i32) {
    %c0_i32 = arith.constant 0 : i32
    %c0_i32_0 = arith.constant 0 : i32
    %c0_i32_1 = arith.constant 0 : i32
    return %c0_i32, %c0_i32_0 : i32, i32
  }
  func.func @transform_3(%arg0: i32, %arg1: i32) -> (i32, i32) {
    %c0_i32 = arith.constant 0 : i32
    %c0_i32_0 = arith.constant 0 : i32
    %c0_i32_1 = arith.constant 0 : i32
    return %c0_i32, %c0_i32_0 : i32, i32
  }
  func.func @transform_4(%arg0: i32, %arg1: i32) -> (i32, i32) {
    %c0_i32 = arith.constant 0 : i32
    %c0_i32_0 = arith.constant 0 : i32
    %c0_i32_1 = arith.constant 0 : i32
    return %c0_i32, %c0_i32_0 : i32, i32
  }
  func.func @transform_5(%arg0: i32, %arg1: i32) -> (i32, i32, i32) {
    %c0_i32 = arith.constant 0 : i32
    %c0_i32_0 = arith.constant 0 : i32
    %c0_i32_1 = arith.constant 0 : i32
    return %arg0, %c0_i32, %c0_i32_0 : i32, i32, i32
  }
}

module attributes {stable_mosaic.version = 11 : i64} {
  func.func @_decoder_kernel(%arg0: i32, %arg1: i32, %arg2: memref<1x64x2xf32, #tpu.memory_space<vmem>>, %arg3: memref<1x1x128xf32, #tpu.memory_space<vmem>>, %arg4: memref<1x1x128xf32, #tpu.memory_space<vmem>>, %arg5: memref<1x1x128xf32, #tpu.memory_space<vmem>>, %arg6: memref<1x64x1xf32, #tpu.memory_space<vmem>>) attributes {dimension_semantics = [#tpu.dimension_semantics<parallel>, #tpu.dimension_semantics<arbitrary>], iteration_bounds = array<i64: 2, 1>, scalar_prefetch = 0 : i64, scratch_operands = 0 : i64, tpu.core_type = #tpu.core_type<tc>, window_params = [{transform_indices = @transform_0, window_bounds = array<i64: 1, 64, 2>}, {transform_indices = @transform_1, window_bounds = array<i64: 1, 1, 128>}, {transform_indices = @transform_2, window_bounds = array<i64: 1, 1, 128>}, {transform_indices = @transform_3, window_bounds = array<i64: 1, 1, 128>}, {transform_indices = @transform_4, window_bounds = array<i64: 1, 64, 1>}]} {
    %c0 = arith.constant 0 : index
    %c0_0 = arith.constant 0 : index
    %c0_1 = arith.constant 0 : index
    %0 = vector.load %arg2[%c0, %c0_0, %c0_1] : memref<1x64x2xf32, #tpu.memory_space<vmem>>, vector<1x64x2xf32>
    %1 = vector.shape_cast %0 : vector<1x64x2xf32> to vector<64x2xf32>
    %2 = vector.extract_strided_slice %1 {offsets = [0, 0], sizes = [64, 1], strides = [1, 1]} : vector<64x2xf32> to vector<64x1xf32>
    %3 = vector.extract_strided_slice %1 {offsets = [0, 1], sizes = [64, 1], strides = [1, 1]} : vector<64x2xf32> to vector<64x1xf32>
    %c0_2 = arith.constant 0 : index
    %c0_3 = arith.constant 0 : index
    %c0_4 = arith.constant 0 : index
    %4 = vector.load %arg3[%c0_2, %c0_3, %c0_4] : memref<1x1x128xf32, #tpu.memory_space<vmem>>, vector<1x1x128xf32>
    %5 = vector.shape_cast %4 : vector<1x1x128xf32> to vector<1x128xf32>
    %c0_5 = arith.constant 0 : index
    %c0_6 = arith.constant 0 : index
    %c0_7 = arith.constant 0 : index
    %6 = vector.load %arg4[%c0_5, %c0_6, %c0_7] : memref<1x1x128xf32, #tpu.memory_space<vmem>>, vector<1x1x128xf32>
    %7 = vector.shape_cast %6 : vector<1x1x128xf32> to vector<1x128xf32>
    %c0_8 = arith.constant 0 : index
    %c0_9 = arith.constant 0 : index
    %c0_10 = arith.constant 0 : index
    %8 = vector.load %arg5[%c0_8, %c0_9, %c0_10] : memref<1x1x128xf32, #tpu.memory_space<vmem>>, vector<1x1x128xf32>
    %9 = vector.shape_cast %8 : vector<1x1x128xf32> to vector<1x128xf32>
    %10 = vector.broadcast %2 : vector<64x1xf32> to vector<64x128xf32>
    %11 = vector.broadcast %5 : vector<1x128xf32> to vector<64x128xf32>
    %12 = arith.mulf %10, %11 : vector<64x128xf32>
    %13 = vector.broadcast %3 : vector<64x1xf32> to vector<64x128xf32>
    %14 = vector.broadcast %7 : vector<1x128xf32> to vector<64x128xf32>
    %15 = arith.mulf %13, %14 : vector<64x128xf32>
    %16 = arith.addf %12, %15 : vector<64x128xf32>
    %17 = vector.broadcast %9 : vector<1x128xf32> to vector<64x128xf32>
    %18 = arith.addf %16, %17 : vector<64x128xf32>
    %cst = arith.constant dense<0x7F800000> : vector<64xf32>
    %19 = vector.multi_reduction <minimumf>, %18, %cst [1] : vector<64x128xf32> to vector<64xf32>
    %20 = vector.shape_cast %19 : vector<64xf32> to vector<64x1xf32>
    %cst_11 = arith.constant 0.000000e+00 : f32
    %21 = vector.broadcast %cst_11 : f32 to vector<64x1xf32>
    %22 = arith.subf %21, %20 : vector<64x1xf32>
    %23 = math.exp %22 : vector<64x1xf32>
    %cst_12 = arith.constant 1.000000e+00 : f32
    %24 = vector.broadcast %cst_12 : f32 to vector<64x1xf32>
    %25 = arith.addf %24, %23 : vector<64x1xf32>
    %26 = tpu.reciprocal %25 {approx = true} : vector<64x1xf32> -> vector<64x1xf32>
    %c0_13 = arith.constant 0 : index
    %c0_14 = arith.constant 0 : index
    %c0_15 = arith.constant 0 : index
    %27 = vector.load %arg6[%c0_13, %c0_14, %c0_15] : memref<1x64x1xf32, #tpu.memory_space<vmem>>, vector<1x64x1xf32>
    %28 = vector.shape_cast %27 : vector<1x64x1xf32> to vector<64x1xf32>
    %29 = vector.shape_cast %26 : vector<64x1xf32> to vector<1x64x1xf32>
    tpu.vector_store %arg6[%c0_13, %c0_14, %c0_15], %29 {strides = array<i32>} : memref<1x64x1xf32, #tpu.memory_space<vmem>>, vector<1x64x1xf32>,
    return
  }
  func.func @transform_0(%arg0: i32, %arg1: i32) -> (i32, i32, i32) {
    %c0_i32 = arith.constant 0 : i32
    %c0_i32_0 = arith.constant 0 : i32
    return %arg0, %arg1, %c0_i32 : i32, i32, i32
  }
  func.func @transform_1(%arg0: i32, %arg1: i32) -> (i32, i32, i32) {
    %c0_i32 = arith.constant 0 : i32
    %c0_i32_0 = arith.constant 0 : i32
    %c0_i32_1 = arith.constant 0 : i32
    return %arg0, %c0_i32, %c0_i32_0 : i32, i32, i32
  }
  func.func @transform_2(%arg0: i32, %arg1: i32) -> (i32, i32, i32) {
    %c0_i32 = arith.constant 0 : i32
    %c0_i32_0 = arith.constant 0 : i32
    %c0_i32_1 = arith.constant 0 : i32
    return %arg0, %c0_i32, %c0_i32_0 : i32, i32, i32
  }
  func.func @transform_3(%arg0: i32, %arg1: i32) -> (i32, i32, i32) {
    %c0_i32 = arith.constant 0 : i32
    %c0_i32_0 = arith.constant 0 : i32
    %c0_i32_1 = arith.constant 0 : i32
    return %arg0, %c0_i32, %c0_i32_0 : i32, i32, i32
  }
  func.func @transform_4(%arg0: i32, %arg1: i32) -> (i32, i32, i32) {
    %c0_i32 = arith.constant 0 : i32
    %c0_i32_0 = arith.constant 0 : i32
    return %arg0, %arg1, %c0_i32 : i32, i32, i32
  }
}

</mosaic_0001>

<llo_original>
// kernel: a_call__.3
$region0: #{a_call__.3}
  #allocation0 [shape = 'u32[]', space=smem, size = 0x4, offset = 0x4, fixed_abs, tag = 'smem constant byte address 0x4 - core index']
  #allocation1 [shape = 'u32[144,128]{1,0:T(1,128)}', space=vmem, size = 0x12000, scoped, tag = 'internal scratch']
  %s0 = inlined_call_operand.vmem [shape: f32[2,64,2], index: 0, kind: input, shape index: {}]
  %s1 = inlined_call_operand.vmem [shape: f32[2,1,128], index: 1, kind: input, shape index: {}]
  %s2 = inlined_call_operand.vmem [shape: f32[2,1,128], index: 2, kind: input, shape index: {}]
  %s3 = inlined_call_operand.vmem [shape: f32[2,1,128], index: 3, kind: input, shape index: {}]
  %s4 = inlined_call_operand.vmem [shape: f32[2,64,1], index: 4, kind: output, shape index: {}]
  %s5 = sld [smem:[#allocation0]]
  $region49: #{a_call__.3} parent=0
    _
  %s7 = ssub.s32 1, %s5
  %s8 = scalar_select 0, %s7, %s5
  loop: start=0, step=1, limit=4
  $region2: #{a_call__.3} parent=0 // loop_pre_header
    _
  $region3: #{a_call__.3} parent=0 // loop_header
    %s10 = sphi 0, %s14
    %p11 = scmp.ge.s32.totalorder %s10, 4
    %s17 = sphi 0, %s29
    %s18 = sphi 0, %s25
    %s19 = sphi 0, %s17
    %s20 = sphi 0, %s18
    %s21 = sphi 0, %s19
    %s22 = sphi 0, %s20
    %s34 = sphi 0, %s36
    %s37 = sphi 0, %s34
    %s38 = sphi 0, %s37
    %s54 = sphi 0, %s38
    %s60 = sphi 0, %s62
    %s63 = sphi 0, %s60
    %s64 = sphi 0, %s63
    %s80 = sphi 0, %s64
    %s86 = sphi 0, %s88
    %s89 = sphi 0, %s86
    %s90 = sphi 0, %s89
    %s106 = sphi 0, %s90
    %s112 = sphi 0, %s114
    %s115 = sphi 0, %s112
    %s116 = sphi 0, %s115
    %s132 = sphi 0, %s116
    %s140 = sphi 0, %s142
    %s143 = sphi 0, %s140
    %s144 = sphi 0, %s143
    %s160 = sphi 0, %s144
  $region4: #{a_call__.3} parent=0 // loop_header_branch
    %13 = sbr.rel (%p11) target = $region8
  $region5: #{a_call__.3} parent=0 // loop_body
    %s15 = ssub.s32 %s10, 1
    %s16 = ssub.s32 %s10, 2
    %s23 = sadd.s32 1, %s18
    %p24 = scmp.ge.s32.totalorder %s23, 1
    %s25 = scalar_select %p24, 0, %s23
    %s26 = sadd.s32 1, %s17
    %s27 = scalar_select %p24, %s26, %s17
    %p28 = scmp.ge.s32.totalorder %s27, 2
    %s29 = scalar_select %p28, 0, %s27
    %s30 = ssub.s32 %s17, %s29
    %s31 = ssub.s32 %s18, %s25
    %s32 = sor.u32 %s30, %s31
    %p33 = scmp.eq.s32.totalorder %s32, 0
    %s35 = sadd.s32 %s34, 1
    %s36 = scalar_select %p33, %s34, %s35
    %p39 = pneg %p33
    %p40 = scmp.eq.s32.totalorder %s10, 1
    %p41 = por %p39, %p40
    %p42 = scmp.ne.s32.totalorder %s34, %s37
    %p43 = scmp.eq.s32.totalorder %s10, 0
    %p44 = por %p42, %p43
    %p45 = scmp.ne.s32.totalorder %s34, %s37
    %p46 = scmp.eq.s32.totalorder %s15, 1
    %p47 = por %p45, %p46
    %p48 = scmp.ne.s32.totalorder %s37, %s38
    %p49 = scmp.eq.s32.totalorder %s15, 0
    %p50 = por %p48, %p49
    %p51 = scmp.ne.s32.totalorder %s37, %s38
    %p52 = scmp.eq.s32.totalorder %s16, 1
    %p53 = por %p51, %p52
    %p55 = scmp.ne.s32.totalorder %s38, %s54
    %p56 = scmp.eq.s32.totalorder %s16, 0
    %p57 = por %p55, %p56
    %s58 = ssub.s32 %s17, %s29
    %p59 = scmp.eq.s32.totalorder %s58, 0
    %s61 = sadd.s32 %s60, 1
    %s62 = scalar_select %p59, %s60, %s61
    %p65 = pneg %p59
    %p66 = scmp.eq.s32.totalorder %s10, 1
    %p67 = por %p65, %p66
    %p68 = scmp.ne.s32.totalorder %s60, %s63
    %p69 = scmp.eq.s32.totalorder %s10, 0
    %p70 = por %p68, %p69
    %p71 = scmp.ne.s32.totalorder %s60, %s63
    %p72 = scmp.eq.s32.totalorder %s15, 1
    %p73 = por %p71, %p72
    %p74 = scmp.ne.s32.totalorder %s63, %s64
    %p75 = scmp.eq.s32.totalorder %s15, 0
    %p76 = por %p74, %p75
    %p77 = scmp.ne.s32.totalorder %s63, %s64
    %p78 = scmp.eq.s32.totalorder %s16, 1
    %p79 = por %p77, %p78
    %p81 = scmp.ne.s32.totalorder %s64, %s80
    %p82 = scmp.eq.s32.totalorder %s16, 0
    %p83 = por %p81, %p82
    %s84 = ssub.s32 %s17, %s29
    %p85 = scmp.eq.s32.totalorder %s84, 0
    %s87 = sadd.s32 %s86, 1
    %s88 = scalar_select %p85, %s86, %s87
    %p91 = pneg %p85
    %p92 = scmp.eq.s32.totalorder %s10, 1
    %p93 = por %p91, %p92
    %p94 = scmp.ne.s32.totalorder %s86, %s89
    %p95 = scmp.eq.s32.totalorder %s10, 0
    %p96 = por %p94, %p95
    %p97 = scmp.ne.s32.totalorder %s86, %s89
    %p98 = scmp.eq.s32.totalorder %s15, 1
    %p99 = por %p97, %p98
    %p100 = scmp.ne.s32.totalorder %s89, %s90
    %p101 = scmp.eq.s32.totalorder %s15, 0
    %p102 = por %p100, %p101
    %p103 = scmp.ne.s32.totalorder %s89, %s90
    %p104 = scmp.eq.s32.totalorder %s16, 1
    %p105 = por %p103, %p104
    %p107 = scmp.ne.s32.totalorder %s90, %s106
    %p108 = scmp.eq.s32.totalorder %s16, 0
    %p109 = por %p107, %p108
    %s110 = ssub.s32 %s17, %s29
    %p111 = scmp.eq.s32.totalorder %s110, 0
    %s113 = sadd.s32 %s112, 1
    %s114 = scalar_select %p111, %s112, %s113
    %p117 = pneg %p111
    %p118 = scmp.eq.s32.totalorder %s10, 1
    %p119 = por %p117, %p118
    %p120 = scmp.ne.s32.totalorder %s112, %s115
    %p121 = scmp.eq.s32.totalorder %s10, 0
    %p122 = por %p120, %p121
    %p123 = scmp.ne.s32.totalorder %s112, %s115
    %p124 = scmp.eq.s32.totalorder %s15, 1
    %p125 = por %p123, %p124
    %p126 = scmp.ne.s32.totalorder %s115, %s116
    %p127 = scmp.eq.s32.totalorder %s15, 0
    %p128 = por %p126, %p127
    %p129 = scmp.ne.s32.totalorder %s115, %s116
    %p130 = scmp.eq.s32.totalorder %s16, 1
    %p131 = por %p129, %p130
    %p133 = scmp.ne.s32.totalorder %s116, %s132
    %p134 = scmp.eq.s32.totalorder %s16, 0
    %p135 = por %p133, %p134
    %s136 = ssub.s32 %s17, %s29
    %s137 = ssub.s32 %s18, %s25
    %s138 = sor.u32 %s136, %s137
    %p139 = scmp.eq.s32.totalorder %s138, 0
    %s141 = sadd.s32 %s140, 1
    %s142 = scalar_select %p139, %s140, %s141
    %p145 = pneg %p139
    %p146 = scmp.eq.s32.totalorder %s10, 1
    %p147 = por %p145, %p146
    %p148 = scmp.ne.s32.totalorder %s140, %s143
    %p149 = scmp.eq.s32.totalorder %s10, 0
    %p150 = por %p148, %p149
    %p151 = scmp.ne.s32.totalorder %s140, %s143
    %p152 = scmp.eq.s32.totalorder %s15, 1
    %p153 = por %p151, %p152
    %p154 = scmp.ne.s32.totalorder %s143, %s144
    %p155 = scmp.eq.s32.totalorder %s15, 0
    %p156 = por %p154, %p155
    %p157 = scmp.ne.s32.totalorder %s143, %s144
    %p158 = scmp.eq.s32.totalorder %s16, 1
    %p159 = por %p157, %p158
    %p161 = scmp.ne.s32.totalorder %s144, %s160
    %p162 = scmp.eq.s32.totalorder %s16, 0
    %p163 = por %p161, %p162
    %p164 = scmp.le.s32.totalorder 1, %s10
    %p165 = scmp.lt.s32.totalorder %s10, 3
    %p166 = pnand %p164, %p165
    %p167 = pneg %p166
    // Predicated region
    $region9: #{a_call__.3} parent=5 // pred_check
      _
    $region10: #{a_call__.3} parent=5 // pred_check_branch
      %169 = sbr.rel (%p166) target = $region12
    $region11: #{a_call__.3} parent=5 // pred_region
      %s170 = ssub.s32 %s10, 1
    $region12: #{a_call__.3} parent=5 // pred_fallthru
      _
    %p171 = scmp.lt.s32.totalorder %s10, 2
    // Predicated region
    $region13: #{a_call__.3} parent=5 // pred_check
      %p172 = pneg %p171
    $region14: #{a_call__.3} parent=5 // pred_check_branch
      %174 = sbr.rel (%p172) target = $region16
    $region15: #{a_call__.3} parent=5 // pred_region
      // Predicated region
      $region17: #{a_call__.3} parent=15 // pred_check
        %p175 = pneg %p44
      $region18: #{a_call__.3} parent=15 // pred_check_branch
        %177 = sbr.rel (%p175) target = $region20
      $region19: #{a_call__.3} parent=15 // pred_region
        %s178 = smul.u32 8, %s18
        %p179 = scmp.lt.s32.totalorder %s17, 1
        %s180 = scalar_select %p179, %s17, 1
        %p181 = scmp.lt.s32.totalorder %s178, 7
        %s182 = scalar_select %p181, %s178, 7
        %s183 = smul.addr %s180, 8
        %s184 = sadd.s32 %s182, %s183
        %s185 = smul.addr %s184, 8
        %s186 = scalar_lea.vmem %s0, %s185
        %s187 = smul.u32 8, %s18
      $region20: #{a_call__.3} parent=15 // pred_fallthru
        _
      // Predicated region
      $region21: #{a_call__.3} parent=15 // pred_check
        %p188 = pneg %p70
      $region22: #{a_call__.3} parent=15 // pred_check_branch
        %190 = sbr.rel (%p188) target = $region24
      $region23: #{a_call__.3} parent=15 // pred_region
        %p191 = scmp.lt.s32.totalorder %s17, 1
        %s192 = scalar_select %p191, %s17, 1
        %s193 = scalar_lea.vmem %s1, %s192
      $region24: #{a_call__.3} parent=15 // pred_fallthru
        _
      // Predicated region
      $region25: #{a_call__.3} parent=15 // pred_check
        %p194 = pneg %p96
      $region26: #{a_call__.3} parent=15 // pred_check_branch
        %196 = sbr.rel (%p194) target = $region28
      $region27: #{a_call__.3} parent=15 // pred_region
        %p197 = scmp.lt.s32.totalorder %s17, 1
        %s198 = scalar_select %p197, %s17, 1
        %s199 = scalar_lea.vmem %s2, %s198
      $region28: #{a_call__.3} parent=15 // pred_fallthru
        _
      // Predicated region
      $region29: #{a_call__.3} parent=15 // pred_check
        %p200 = pneg %p122
      $region30: #{a_call__.3} parent=15 // pred_check_branch
        %202 = sbr.rel (%p200) target = $region32
      $region31: #{a_call__.3} parent=15 // pred_region
        %p203 = scmp.lt.s32.totalorder %s17, 1
        %s204 = scalar_select %p203, %s17, 1
        %s205 = scalar_lea.vmem %s3, %s204
      $region32: #{a_call__.3} parent=15 // pred_fallthru
        _
    $region16: #{a_call__.3} parent=5 // pred_fallthru
      _
    %p206 = scmp.le.s32.totalorder 1, %s10
    %p207 = scmp.lt.s32.totalorder %s10, 3
    %p208 = pnand %p206, %p207
    %p209 = pneg %p208
    // Predicated region
    $region33: #{a_call__.3} parent=5 // pred_check
      _
    $region34: #{a_call__.3} parent=5 // pred_check_branch
      %211 = sbr.rel (%p208) target = $region36
    $region35: #{a_call__.3} parent=5 // pred_region
      %s212 = ssub.s32 %s10, 1
      %s213 = smul.u32 8, %s20
      %p214 = scmp.lt.s32.totalorder %s19, 1
      %s215 = scalar_select %p214, %s19, 1
      %p216 = scmp.lt.s32.totalorder %s213, 7
      %s217 = scalar_select %p216, %s213, 7
      %s218 = smul.addr %s215, 8
      %s219 = sadd.s32 %s217, %s218
      %s220 = smul.addr %s219, 8
      %s221 = scalar_lea.vmem %s0, %s220
      %p222 = pneg %p50
      %p223 = pneg %p47
      %p224 = scmp.lt.s32.totalorder %s19, 1
      %s225 = scalar_select %p224, %s19, 1
      %s226 = scalar_lea.vmem %s1, %s225
      %p227 = pneg %p76
      %p228 = pneg %p73
      %p229 = scmp.lt.s32.totalorder %s19, 1
      %s230 = scalar_select %p229, %s19, 1
      %s231 = scalar_lea.vmem %s2, %s230
      %p232 = pneg %p102
      %p233 = pneg %p99
      %p234 = scmp.lt.s32.totalorder %s19, 1
      %s235 = scalar_select %p234, %s19, 1
      %s236 = scalar_lea.vmem %s3, %s235
      %p237 = pneg %p128
      %p238 = pneg %p125
      %p239 = pneg %p156
      %p240 = pneg %p153
      %s241 = smul.u32 8, %s20
      %p242 = scmp.lt.s32.totalorder %s19, 1
      %s243 = scalar_select %p242, %s19, 1
      %p244 = scmp.lt.s32.totalorder %s241, 7
      %s245 = scalar_select %p244, %s241, 7
      %s246 = smul.addr %s243, 8
      %s247 = sadd.s32 %s245, %s246
      %s248 = smul.addr %s247, 8
      %s249 = scalar_lea.vmem %s4, %s248
      %s250 = smul.u32 8, %s20
      %p251 = scmp.lt.s32.totalorder %s19, 1
      %s252 = scalar_select %p251, %s19, 1
      %p253 = scmp.lt.s32.totalorder %s250, 7
      %s254 = scalar_select %p253, %s250, 7
      %s255 = smul.addr %s252, 8
      %s256 = sadd.s32 %s254, %s255
      %s257 = smul.addr %s256, 8
      %s258 = scalar_lea.vmem %s0, %s257
      %s259 = smul.u32 8, %s20
      %p260 = scmp.lt.s32.totalorder %s19, 1
      %s261 = scalar_select %p260, %s19, 1
      %s262 = scalar_lea.vmem %s1, %s261
      %p263 = scmp.lt.s32.totalorder %s19, 1
      %s264 = scalar_select %p263, %s19, 1
      %s265 = scalar_lea.vmem %s2, %s264
      %p266 = scmp.lt.s32.totalorder %s19, 1
      %s267 = scalar_select %p266, %s19, 1
      %s268 = scalar_lea.vmem %s3, %s267
      %s269 = smul.u32 8, %s20
      %p270 = scmp.lt.s32.totalorder %s19, 1
      %s271 = scalar_select %p270, %s19, 1
      %p272 = scmp.lt.s32.totalorder %s269, 7
      %s273 = scalar_select %p272, %s269, 7
      %s274 = smul.addr %s271, 8
      %s275 = sadd.s32 %s273, %s274
      %s276 = smul.addr %s275, 8
      %s277 = scalar_lea.vmem %s4, %s276
      %s278 = smul.u32 8, %s20
      %v279 = vld [vmem:[%s258] sm:$0xff]
      %v280 = vld [vmem:[%s258 + $0x8] sm:$0xff]
      %v281 = vld [vmem:[%s258 + $0x10] sm:$0xff]
      %v282 = vld [vmem:[%s258 + $0x18] sm:$0xff]
      %v283 = vld [vmem:[%s258 + $0x20] sm:$0xff]
      %v284 = vld [vmem:[%s258 + $0x28] sm:$0xff]
      %v285 = vld [vmem:[%s258 + $0x30] sm:$0xff]
      %v286 = vld [vmem:[%s258 + $0x38] sm:$0xff]
      %v287 = vld [vmem:[%s262] sm:$0x1]
      %v288 = vld [vmem:[%s265] sm:$0x1]
      %v289 = vld [vmem:[%s268] sm:$0x1]
      %291 = vset.pattern.permute.xlu0 0
      %292 = vperm.xlu0 %291, %v279
      %v293 = vpop.permute.xlu0 %292
      %296 = vset.pattern.permute.xlu0 0
      %297 = vperm.xlu0 %296, %v280
      %v298 = vpop.permute.xlu0 %297
      %301 = vset.pattern.permute.xlu0 0
      %302 = vperm.xlu0 %301, %v281
      %v303 = vpop.permute.xlu0 %302
      %306 = vset.pattern.permute.xlu0 0
      %307 = vperm.xlu0 %306, %v282
      %v308 = vpop.permute.xlu0 %307
      %311 = vset.pattern.permute.xlu0 0
      %312 = vperm.xlu0 %311, %v283
      %v313 = vpop.permute.xlu0 %312
      %316 = vset.pattern.permute.xlu0 0
      %317 = vperm.xlu0 %316, %v284
      %v318 = vpop.permute.xlu0 %317
      %321 = vset.pattern.permute.xlu0 0
      %322 = vperm.xlu0 %321, %v285
      %v323 = vpop.permute.xlu0 %322
      %326 = vset.pattern.permute.xlu0 0
      %327 = vperm.xlu0 %326, %v286
      %v328 = vpop.permute.xlu0 %327
      %v331 = vlaneseq
      %v332 = vshrl.u32 %v331, 7
      %v333 = vsub.s32 0, %v332
      %v334 = vrot.slane %v287, %v333
      %v336 = vmul.f32 %v293, %v334
      %v337 = vmul.f32 %v298, %v334
      %v338 = vmul.f32 %v303, %v334
      %v339 = vmul.f32 %v308, %v334
      %v340 = vmul.f32 %v313, %v334
      %v341 = vmul.f32 %v318, %v334
      %v342 = vmul.f32 %v323, %v334
      %v343 = vmul.f32 %v328, %v334
      %344 = vset.pattern.permute.xlu0 1
      %345 = vperm.xlu0 %344, %v279
      %v346 = vpop.permute.xlu0 %345
      %348 = vset.pattern.permute.xlu0 1
      %349 = vperm.xlu0 %348, %v280
      %v350 = vpop.permute.xlu0 %349
      %352 = vset.pattern.permute.xlu0 1
      %353 = vperm.xlu0 %352, %v281
      %v354 = vpop.permute.xlu0 %353
      %356 = vset.pattern.permute.xlu0 1
      %357 = vperm.xlu0 %356, %v282
      %v358 = vpop.permute.xlu0 %357
      %360 = vset.pattern.permute.xlu0 1
      %361 = vperm.xlu0 %360, %v283
      %v362 = vpop.permute.xlu0 %361
      %364 = vset.pattern.permute.xlu0 1
      %365 = vperm.xlu0 %364, %v284
      %v366 = vpop.permute.xlu0 %365
      %368 = vset.pattern.permute.xlu0 1
      %369 = vperm.xlu0 %368, %v285
      %v370 = vpop.permute.xlu0 %369
      %372 = vset.pattern.permute.xlu0 1
      %373 = vperm.xlu0 %372, %v286
      %v374 = vpop.permute.xlu0 %373
      %v377 = vlaneseq
      %v378 = vshrl.u32 %v377, 7
      %v379 = vsub.s32 0, %v378
      %v380 = vrot.slane %v288, %v379
      %v382 = vmul.f32 %v346, %v380
      %v383 = vmul.f32 %v350, %v380
      %v384 = vmul.f32 %v354, %v380
      %v385 = vmul.f32 %v358, %v380
      %v386 = vmul.f32 %v362, %v380
      %v387 = vmul.f32 %v366, %v380
      %v388 = vmul.f32 %v370, %v380
      %v389 = vmul.f32 %v374, %v380
      %v390 = vadd.f32 %v336, %v382
      %v391 = vadd.f32 %v337, %v383
      %v392 = vadd.f32 %v338, %v384
      %v393 = vadd.f32 %v339, %v385
      %v394 = vadd.f32 %v340, %v386
      %v395 = vadd.f32 %v341, %v387
      %v396 = vadd.f32 %v342, %v388
      %v397 = vadd.f32 %v343, %v389
      %v399 = vlaneseq
      %v400 = vshrl.u32 %v399, 7
      %v401 = vsub.s32 0, %v400
      %v402 = vrot.slane %v289, %v401
      %v404 = vadd.f32 %v390, %v402
      %v405 = vadd.f32 %v391, %v402
      %v406 = vadd.f32 %v392, %v402
      %v407 = vadd.f32 %v393, %v402
      %v408 = vadd.f32 %v394, %v402
      %v409 = vadd.f32 %v395, %v402
      %v410 = vadd.f32 %v396, %v402
      %v411 = vadd.f32 %v397, %v402
      %412 = vmin.xlane.f32.xlu0 %v404
      %v413 = vpop.xlane.xlu0 %412
      %414 = vmin.xlane.f32.xlu0 %v405
      %v415 = vpop.xlane.xlu0 %414
      %416 = vmin.xlane.f32.xlu0 %v406
      %v417 = vpop.xlane.xlu0 %416
      %418 = vmin.xlane.f32.xlu0 %v407
      %v419 = vpop.xlane.xlu0 %418
      %420 = vmin.xlane.f32.xlu0 %v408
      %v421 = vpop.xlane.xlu0 %420
      %422 = vmin.xlane.f32.xlu0 %v409
      %v423 = vpop.xlane.xlu0 %422
      %424 = vmin.xlane.f32.xlu0 %v410
      %v425 = vpop.xlane.xlu0 %424
      %426 = vmin.xlane.f32.xlu0 %v411
      %v427 = vpop.xlane.xlu0 %426
      %v428 = vsub.f32 0.0, %v413
      %v429 = vsub.f32 0.0, %v415
      %v430 = vsub.f32 0.0, %v417
      %v431 = vsub.f32 0.0, %v419
      %v432 = vsub.f32 0.0, %v421
      %v433 = vsub.f32 0.0, %v423
      %v434 = vsub.f32 0.0, %v425
      %v435 = vsub.f32 0.0, %v427
      %v436 = vmul.f32 %v428, 1.442695
      %v437 = vpow.pop %v436
      %v438 = vmul.f32 %v429, 1.442695
      %v439 = vpow.pop %v438
      %v440 = vmul.f32 %v430, 1.442695
      %v441 = vpow.pop %v440
      %v442 = vmul.f32 %v431, 1.442695
      %v443 = vpow.pop %v442
      %v444 = vmul.f32 %v432, 1.442695
      %v445 = vpow.pop %v444
      %v446 = vmul.f32 %v433, 1.442695
      %v447 = vpow.pop %v446
      %v448 = vmul.f32 %v434, 1.442695
      %v449 = vpow.pop %v448
      %v450 = vmul.f32 %v435, 1.442695
      %v451 = vpow.pop %v450
      %v452 = vadd.f32 %v437, 1.0
      %v453 = vadd.f32 %v439, 1.0
      %v454 = vadd.f32 %v441, 1.0
      %v455 = vadd.f32 %v443, 1.0
      %v456 = vadd.f32 %v445, 1.0
      %v457 = vadd.f32 %v447, 1.0
      %v458 = vadd.f32 %v449, 1.0
      %v459 = vadd.f32 %v451, 1.0
      %v460 = vrcp.pop %v452
      %v461 = vrcp.pop %v453
      %v462 = vrcp.pop %v454
      %v463 = vrcp.pop %v455
      %v464 = vrcp.pop %v456
      %v465 = vrcp.pop %v457
      %v466 = vrcp.pop %v458
      %v467 = vrcp.pop %v459
      %vm468 = vcmask 7168
      %469 = vst.msk [vmem:[%s277] sm:$0xff] %vm468, %v460
      %470 = vst.msk [vmem:[%s277 + $0x8] sm:$0xff] %vm468, %v461
      %471 = vst.msk [vmem:[%s277 + $0x10] sm:$0xff] %vm468, %v462
      %472 = vst.msk [vmem:[%s277 + $0x18] sm:$0xff] %vm468, %v463
      %473 = vst.msk [vmem:[%s277 + $0x20] sm:$0xff] %vm468, %v464
      %474 = vst.msk [vmem:[%s277 + $0x28] sm:$0xff] %vm468, %v465
      %475 = vst.msk [vmem:[%s277 + $0x30] sm:$0xff] %vm468, %v466
      %476 = vst.msk [vmem:[%s277 + $0x38] sm:$0xff] %vm468, %v467
      %s477 = smul.u32 8, %s20
      %p478 = scmp.lt.s32.totalorder %s19, 1
      %s479 = scalar_select %p478, %s19, 1
      %p480 = scmp.lt.s32.totalorder %s477, 7
      %s481 = scalar_select %p480, %s477, 7
      %s482 = smul.addr %s479, 8
      %s483 = sadd.s32 %s481, %s482
      %s484 = smul.addr %s483, 8
      %s485 = scalar_lea.vmem %s4, %s484
      // Predicated region
      $region37: #{a_call__.3} parent=35 // pred_check
        %p486 = pneg %p153
      $region38: #{a_call__.3} parent=35 // pred_check_branch
        %488 = sbr.rel (%p486) target = $region40
      $region39: #{a_call__.3} parent=35 // pred_region
        %s489 = smul.u32 8, %s20
      $region40: #{a_call__.3} parent=35 // pred_fallthru
        _
    $region36: #{a_call__.3} parent=5 // pred_fallthru
      _
    %p490 = scmp.le.s32.totalorder 2, %s10
    // Predicated region
    $region41: #{a_call__.3} parent=5 // pred_check
      %p491 = pneg %p490
    $region42: #{a_call__.3} parent=5 // pred_check_branch
      %493 = sbr.rel (%p491) target = $region44
    $region43: #{a_call__.3} parent=5 // pred_region
      %s494 = ssub.s32 %s10, 2
      // Predicated region
      $region45: #{a_call__.3} parent=43 // pred_check
        %p495 = pneg %p159
      $region46: #{a_call__.3} parent=43 // pred_check_branch
        %497 = sbr.rel (%p495) target = $region48
      $region47: #{a_call__.3} parent=43 // pred_region
        %s498 = smul.u32 8, %s22
        %p499 = scmp.lt.s32.totalorder %s21, 1
        %s500 = scalar_select %p499, %s21, 1
        %p501 = scmp.lt.s32.totalorder %s498, 7
        %s502 = scalar_select %p501, %s498, 7
        %s503 = smul.addr %s500, 8
        %s504 = sadd.s32 %s502, %s503
        %s505 = smul.addr %s504, 8
        %s506 = scalar_lea.vmem %s4, %s505
      $region48: #{a_call__.3} parent=43 // pred_fallthru
        _
    $region44: #{a_call__.3} parent=5 // pred_fallthru
      _
  $region6: #{a_call__.3} parent=0 // loop_footer
    %s14 = sadd.s32 1, %s10
  $region7: #{a_call__.3} parent=0 // loop_footer_branch
    %9 = sbr.rel target = $region3
  $region8: #{a_call__.3} parent=0 // loop_exit
    _

// kernel: a_call__.2
$region0: #{a_call__.2}
  #allocation0 [shape = 'u32[]', space=smem, size = 0x4, offset = 0x4, fixed_abs, tag = 'smem constant byte address 0x4 - core index']
  #allocation1 [shape = 'u32[144,128]{1,0:T(1,128)}', space=vmem, size = 0x12000, scoped, tag = 'internal scratch']
  #allocation2 [shape = 'f32[1,128]{1,0:T(1,128)}', space=vmem, size = 0x200, scoped, tag = 'scratch operand']
  %s0 = inlined_call_operand.vmem [shape: bf16[2,256,128], index: 0, kind: input, shape index: {}]
  %s1 = inlined_call_operand.vmem [shape: bf16[128,128], index: 1, kind: input, shape index: {}]
  %s2 = inlined_call_operand.vmem [shape: f32[1,128], index: 2, kind: input, shape index: {}]
  %s3 = inlined_call_operand.vmem [shape: bf16[128,128], index: 3, kind: input, shape index: {}]
  %s4 = inlined_call_operand.vmem [shape: f32[1,128], index: 4, kind: input, shape index: {}]
  %s5 = inlined_call_operand.vmem [shape: f32[2,1,128], index: 5, kind: output, shape index: {}]
  %s6 = sld [smem:[#allocation0]]
  $region61: #{a_call__.2} parent=0
    _
  %s8 = ssub.s32 1, %s6
  %s9 = scalar_select 0, %s8, %s6
  loop: start=0, step=1, limit=4
  $region2: #{a_call__.2} parent=0 // loop_pre_header
    _
  $region3: #{a_call__.2} parent=0 // loop_header
    %s11 = sphi 0, %s15
    %p12 = scmp.ge.s32.totalorder %s11, 4
    %s18 = sphi 0, %s30
    %s19 = sphi 0, %s26
    %s20 = sphi 0, %s18
    %s21 = sphi 0, %s19
    %s22 = sphi 0, %s20
    %s23 = sphi 0, %s21
    %s35 = sphi 0, %s37
    %s38 = sphi 0, %s35
    %s39 = sphi 0, %s38
    %s55 = sphi 0, %s39
    %s59 = sphi 0, %s59
    %s61 = sphi 0, %s59
    %s62 = sphi 0, %s61
    %s76 = sphi 0, %s62
    %s80 = sphi 0, %s80
    %s82 = sphi 0, %s80
    %s83 = sphi 0, %s82
    %s97 = sphi 0, %s83
    %s101 = sphi 0, %s101
    %s103 = sphi 0, %s101
    %s104 = sphi 0, %s103
    %s118 = sphi 0, %s104
    %s122 = sphi 0, %s122
    %s124 = sphi 0, %s122
    %s125 = sphi 0, %s124
    %s139 = sphi 0, %s125
    %s145 = sphi 0, %s147
    %s148 = sphi 0, %s145
    %s149 = sphi 0, %s148
    %s165 = sphi 0, %s149
  $region4: #{a_call__.2} parent=0 // loop_header_branch
    %14 = sbr.rel (%p12) target = $region8
  $region5: #{a_call__.2} parent=0 // loop_body
    %s16 = ssub.s32 %s11, 1
    %s17 = ssub.s32 %s11, 2
    %s24 = sadd.s32 1, %s19
    %p25 = scmp.ge.s32.totalorder %s24, 1
    %s26 = scalar_select %p25, 0, %s24
    %s27 = sadd.s32 1, %s18
    %s28 = scalar_select %p25, %s27, %s18
    %p29 = scmp.ge.s32.totalorder %s28, 2
    %s30 = scalar_select %p29, 0, %s28
    %s31 = ssub.s32 %s18, %s30
    %s32 = ssub.s32 %s19, %s26
    %s33 = sor.u32 %s31, %s32
    %p34 = scmp.eq.s32.totalorder %s33, 0
    %s36 = sadd.s32 %s35, 1
    %s37 = scalar_select %p34, %s35, %s36
    %p40 = pneg %p34
    %p41 = scmp.eq.s32.totalorder %s11, 1
    %p42 = por %p40, %p41
    %p43 = scmp.ne.s32.totalorder %s35, %s38
    %p44 = scmp.eq.s32.totalorder %s11, 0
    %p45 = por %p43, %p44
    %p46 = scmp.ne.s32.totalorder %s35, %s38
    %p47 = scmp.eq.s32.totalorder %s16, 1
    %p48 = por %p46, %p47
    %p49 = scmp.ne.s32.totalorder %s38, %s39
    %p50 = scmp.eq.s32.totalorder %s16, 0
    %p51 = por %p49, %p50
    %p52 = scmp.ne.s32.totalorder %s38, %s39
    %p53 = scmp.eq.s32.totalorder %s17, 1
    %p54 = por %p52, %p53
    %p56 = scmp.ne.s32.totalorder %s39, %s55
    %p57 = scmp.eq.s32.totalorder %s17, 0
    %p58 = por %p56, %p57
    %s60 = sadd.s32 %s59, 1
    %p63 = scmp.eq.s32.totalorder %s11, 1
    %p64 = scmp.ne.s32.totalorder %s59, %s61
    %p65 = scmp.eq.s32.totalorder %s11, 0
    %p66 = por %p64, %p65
    %p67 = scmp.ne.s32.totalorder %s59, %s61
    %p68 = scmp.eq.s32.totalorder %s16, 1
    %p69 = por %p67, %p68
    %p70 = scmp.ne.s32.totalorder %s61, %s62
    %p71 = scmp.eq.s32.totalorder %s16, 0
    %p72 = por %p70, %p71
    %p73 = scmp.ne.s32.totalorder %s61, %s62
    %p74 = scmp.eq.s32.totalorder %s17, 1
    %p75 = por %p73, %p74
    %p77 = scmp.ne.s32.totalorder %s62, %s76
    %p78 = scmp.eq.s32.totalorder %s17, 0
    %p79 = por %p77, %p78
    %s81 = sadd.s32 %s80, 1
    %p84 = scmp.eq.s32.totalorder %s11, 1
    %p85 = scmp.ne.s32.totalorder %s80, %s82
    %p86 = scmp.eq.s32.totalorder %s11, 0
    %p87 = por %p85, %p86
    %p88 = scmp.ne.s32.totalorder %s80, %s82
    %p89 = scmp.eq.s32.totalorder %s16, 1
    %p90 = por %p88, %p89
    %p91 = scmp.ne.s32.totalorder %s82, %s83
    %p92 = scmp.eq.s32.totalorder %s16, 0
    %p93 = por %p91, %p92
    %p94 = scmp.ne.s32.totalorder %s82, %s83
    %p95 = scmp.eq.s32.totalorder %s17, 1
    %p96 = por %p94, %p95
    %p98 = scmp.ne.s32.totalorder %s83, %s97
    %p99 = scmp.eq.s32.totalorder %s17, 0
    %p100 = por %p98, %p99
    %s102 = sadd.s32 %s101, 1
    %p105 = scmp.eq.s32.totalorder %s11, 1
    %p106 = scmp.ne.s32.totalorder %s101, %s103
    %p107 = scmp.eq.s32.totalorder %s11, 0
    %p108 = por %p106, %p107
    %p109 = scmp.ne.s32.totalorder %s101, %s103
    %p110 = scmp.eq.s32.totalorder %s16, 1
    %p111 = por %p109, %p110
    %p112 = scmp.ne.s32.totalorder %s103, %s104
    %p113 = scmp.eq.s32.totalorder %s16, 0
    %p114 = por %p112, %p113
    %p115 = scmp.ne.s32.totalorder %s103, %s104
    %p116 = scmp.eq.s32.totalorder %s17, 1
    %p117 = por %p115, %p116
    %p119 = scmp.ne.s32.totalorder %s104, %s118
    %p120 = scmp.eq.s32.totalorder %s17, 0
    %p121 = por %p119, %p120
    %s123 = sadd.s32 %s122, 1
    %p126 = scmp.eq.s32.totalorder %s11, 1
    %p127 = scmp.ne.s32.totalorder %s122, %s124
    %p128 = scmp.eq.s32.totalorder %s11, 0
    %p129 = por %p127, %p128
    %p130 = scmp.ne.s32.totalorder %s122, %s124
    %p131 = scmp.eq.s32.totalorder %s16, 1
    %p132 = por %p130, %p131
    %p133 = scmp.ne.s32.totalorder %s124, %s125
    %p134 = scmp.eq.s32.totalorder %s16, 0
    %p135 = por %p133, %p134
    %p136 = scmp.ne.s32.totalorder %s124, %s125
    %p137 = scmp.eq.s32.totalorder %s17, 1
    %p138 = por %p136, %p137
    %p140 = scmp.ne.s32.totalorder %s125, %s139
    %p141 = scmp.eq.s32.totalorder %s17, 0
    %p142 = por %p140, %p141
    %s143 = ssub.s32 %s18, %s30
    %p144 = scmp.eq.s32.totalorder %s143, 0
    %s146 = sadd.s32 %s145, 1
    %s147 = scalar_select %p144, %s145, %s146
    %p150 = pneg %p144
    %p151 = scmp.eq.s32.totalorder %s11, 1
    %p152 = por %p150, %p151
    %p153 = scmp.ne.s32.totalorder %s145, %s148
    %p154 = scmp.eq.s32.totalorder %s11, 0
    %p155 = por %p153, %p154
    %p156 = scmp.ne.s32.totalorder %s145, %s148
    %p157 = scmp.eq.s32.totalorder %s16, 1
    %p158 = por %p156, %p157
    %p159 = scmp.ne.s32.totalorder %s148, %s149
    %p160 = scmp.eq.s32.totalorder %s16, 0
    %p161 = por %p159, %p160
    %p162 = scmp.ne.s32.totalorder %s148, %s149
    %p163 = scmp.eq.s32.totalorder %s17, 1
    %p164 = por %p162, %p163
    %p166 = scmp.ne.s32.totalorder %s149, %s165
    %p167 = scmp.eq.s32.totalorder %s17, 0
    %p168 = por %p166, %p167
    %p169 = scmp.le.s32.totalorder 1, %s11
    %p170 = scmp.lt.s32.totalorder %s11, 3
    %p171 = pnand %p169, %p170
    %p172 = pneg %p171
    // Predicated region
    $region9: #{a_call__.2} parent=5 // pred_check
      _
    $region10: #{a_call__.2} parent=5 // pred_check_branch
      %174 = sbr.rel (%p171) target = $region12
    $region11: #{a_call__.2} parent=5 // pred_region
      %s175 = ssub.s32 %s11, 1
      // Predicated region
      $region13: #{a_call__.2} parent=11 // pred_check
        %p176 = pneg %p72
      $region14: #{a_call__.2} parent=11 // pred_check_branch
        %178 = sbr.rel (%p176) target = $region16
      $region15: #{a_call__.2} parent=11 // pred_region
        _
      $region16: #{a_call__.2} parent=11 // pred_fallthru
        _
      // Predicated region
      $region17: #{a_call__.2} parent=11 // pred_check
        %p179 = pneg %p93
      $region18: #{a_call__.2} parent=11 // pred_check_branch
        %181 = sbr.rel (%p179) target = $region20
      $region19: #{a_call__.2} parent=11 // pred_region
        _
      $region20: #{a_call__.2} parent=11 // pred_fallthru
        _
      // Predicated region
      $region21: #{a_call__.2} parent=11 // pred_check
        %p182 = pneg %p114
      $region22: #{a_call__.2} parent=11 // pred_check_branch
        %184 = sbr.rel (%p182) target = $region24
      $region23: #{a_call__.2} parent=11 // pred_region
        _
      $region24: #{a_call__.2} parent=11 // pred_fallthru
        _
      // Predicated region
      $region25: #{a_call__.2} parent=11 // pred_check
        %p185 = pneg %p135
      $region26: #{a_call__.2} parent=11 // pred_check_branch
        %187 = sbr.rel (%p185) target = $region28
      $region27: #{a_call__.2} parent=11 // pred_region
        _
      $region28: #{a_call__.2} parent=11 // pred_fallthru
        _
    $region12: #{a_call__.2} parent=5 // pred_fallthru
      _
    %p188 = scmp.lt.s32.totalorder %s11, 2
    // Predicated region
    $region29: #{a_call__.2} parent=5 // pred_check
      %p189 = pneg %p188
    $region30: #{a_call__.2} parent=5 // pred_check_branch
      %191 = sbr.rel (%p189) target = $region32
    $region31: #{a_call__.2} parent=5 // pred_region
      // Predicated region
      $region33: #{a_call__.2} parent=31 // pred_check
        %p192 = pneg %p45
      $region34: #{a_call__.2} parent=31 // pred_check_branch
        %194 = sbr.rel (%p192) target = $region36
      $region35: #{a_call__.2} parent=31 // pred_region
        %s195 = smul.u32 32, %s19
        %p196 = scmp.lt.s32.totalorder %s18, 1
        %s197 = scalar_select %p196, %s18, 1
        %p198 = scmp.lt.s32.totalorder %s195, 31
        %s199 = scalar_select %p198, %s195, 31
        %s200 = smul.addr %s197, 32
        %s201 = sadd.s32 %s199, %s200
        %s202 = smul.addr %s201, 4
        %s203 = scalar_lea.vmem %s0, %s202
        %s204 = smul.u32 32, %s19
      $region36: #{a_call__.2} parent=31 // pred_fallthru
        _
    $region32: #{a_call__.2} parent=5 // pred_fallthru
      _
    %p205 = scmp.le.s32.totalorder 1, %s11
    %p206 = scmp.lt.s32.totalorder %s11, 3
    %p207 = pnand %p205, %p206
    %p208 = pneg %p207
    // Predicated region
    $region37: #{a_call__.2} parent=5 // pred_check
      _
    $region38: #{a_call__.2} parent=5 // pred_check_branch
      %210 = sbr.rel (%p207) target = $region40
    $region39: #{a_call__.2} parent=5 // pred_region
      %s211 = ssub.s32 %s11, 1
      %s212 = smul.u32 32, %s21
      %p213 = scmp.lt.s32.totalorder %s20, 1
      %s214 = scalar_select %p213, %s20, 1
      %p215 = scmp.lt.s32.totalorder %s212, 31
      %s216 = scalar_select %p215, %s212, 31
      %s217 = smul.addr %s214, 32
      %s218 = sadd.s32 %s216, %s217
      %s219 = smul.addr %s218, 4
      %s220 = scalar_lea.vmem %s0, %s219
      %p221 = pneg %p51
      %p222 = pneg %p48
      %p223 = pneg %p72
      %p224 = pneg %p69
      %p225 = pneg %p93
      %p226 = pneg %p90
      %p227 = pneg %p114
      %p228 = pneg %p111
      %p229 = pneg %p135
      %p230 = pneg %p132
      %p231 = pneg %p161
      %p232 = pneg %p158
      %p233 = scmp.lt.s32.totalorder %s20, 1
      %s234 = scalar_select %p233, %s20, 1
      %s235 = scalar_lea.vmem %s5, %s234
      %s236 = smul.u32 32, %s21
      %p237 = scmp.lt.s32.totalorder %s20, 1
      %s238 = scalar_select %p237, %s20, 1
      %p239 = scmp.lt.s32.totalorder %s236, 31
      %s240 = scalar_select %p239, %s236, 31
      %s241 = smul.addr %s238, 32
      %s242 = sadd.s32 %s240, %s241
      %s243 = smul.addr %s242, 4
      %s244 = scalar_lea.vmem %s0, %s243
      %s245 = smul.u32 32, %s21
      %p246 = scmp.lt.s32.totalorder %s20, 1
      %s247 = scalar_select %p246, %s20, 1
      %s248 = scalar_lea.vmem %s5, %s247
      %p250 = scmp.eq.s32.totalorder %s21, 0
      // Predicated region
      $region41: #{a_call__.2} parent=39 // pred_check
        %p251 = pneg %p250
      $region42: #{a_call__.2} parent=39 // pred_check_branch
        %253 = sbr.rel (%p251) target = $region44
      $region43: #{a_call__.2} parent=39 // pred_region
        %254 = vst [vmem:[#allocation2] sm:$0x1] 0.0
      $region44: #{a_call__.2} parent=39 // pred_fallthru
        _
      %v255 = vld [vmem:[%s244] sm:$0xf]
      %v256 = vld [vmem:[%s244 + $0x4] sm:$0xf]
      %v257 = vld [vmem:[%s244 + $0x8] sm:$0xf]
      %v258 = vld [vmem:[%s244 + $0xc] sm:$0xf]
      %v259 = vld [vmem:[%s244 + $0x10] sm:$0xf]
      %v260 = vld [vmem:[%s244 + $0x14] sm:$0xf]
      %v261 = vld [vmem:[%s244 + $0x18] sm:$0xf]
      %v262 = vld [vmem:[%s244 + $0x1c] sm:$0xf]
      %v263 = vld [vmem:[%s244 + $0x20] sm:$0xf]
      %v264 = vld [vmem:[%s244 + $0x24] sm:$0xf]
      %v265 = vld [vmem:[%s244 + $0x28] sm:$0xf]
      %v266 = vld [vmem:[%s244 + $0x2c] sm:$0xf]
      %v267 = vld [vmem:[%s244 + $0x30] sm:$0xf]
      %v268 = vld [vmem:[%s244 + $0x34] sm:$0xf]
      %v269 = vld [vmem:[%s244 + $0x38] sm:$0xf]
      %v270 = vld [vmem:[%s244 + $0x3c] sm:$0xf]
      %v271 = vld [vmem:[%s244 + $0x40] sm:$0xf]
      %v272 = vld [vmem:[%s244 + $0x44] sm:$0xf]
      %v273 = vld [vmem:[%s244 + $0x48] sm:$0xf]
      %v274 = vld [vmem:[%s244 + $0x4c] sm:$0xf]
      %v275 = vld [vmem:[%s244 + $0x50] sm:$0xf]
      %v276 = vld [vmem:[%s244 + $0x54] sm:$0xf]
      %v277 = vld [vmem:[%s244 + $0x58] sm:$0xf]
      %v278 = vld [vmem:[%s244 + $0x5c] sm:$0xf]
      %v279 = vld [vmem:[%s244 + $0x60] sm:$0xf]
      %v280 = vld [vmem:[%s244 + $0x64] sm:$0xf]
      %v281 = vld [vmem:[%s244 + $0x68] sm:$0xf]
      %v282 = vld [vmem:[%s244 + $0x6c] sm:$0xf]
      %v283 = vld [vmem:[%s244 + $0x70] sm:$0xf]
      %v284 = vld [vmem:[%s244 + $0x74] sm:$0xf]
      %v285 = vld [vmem:[%s244 + $0x78] sm:$0xf]
      %v286 = vld [vmem:[%s244 + $0x7c] sm:$0xf]
      %v287 = vld [vmem:[%s1] sm:$0xf]
      %v288 = vld [vmem:[%s1 + $0x4] sm:$0xf]
      %v289 = vld [vmem:[%s1 + $0x8] sm:$0xf]
      %v290 = vld [vmem:[%s1 + $0xc] sm:$0xf]
      %v291 = vld [vmem:[%s1 + $0x10] sm:$0xf]
      %v292 = vld [vmem:[%s1 + $0x14] sm:$0xf]
      %v293 = vld [vmem:[%s1 + $0x18] sm:$0xf]
      %v294 = vld [vmem:[%s1 + $0x1c] sm:$0xf]
      %v295 = vld [vmem:[%s1 + $0x20] sm:$0xf]
      %v296 = vld [vmem:[%s1 + $0x24] sm:$0xf]
      %v297 = vld [vmem:[%s1 + $0x28] sm:$0xf]
      %v298 = vld [vmem:[%s1 + $0x2c] sm:$0xf]
      %v299 = vld [vmem:[%s1 + $0x30] sm:$0xf]
      %v300 = vld [vmem:[%s1 + $0x34] sm:$0xf]
      %v301 = vld [vmem:[%s1 + $0x38] sm:$0xf]
      %v302 = vld [vmem:[%s1 + $0x3c] sm:$0xf]
      %v303 = vld [vmem:[%s2] sm:$0x1]
      %v305 = vlaneseq
      %v306 = vshrl.u32 %v305, 7
      %v307 = vsub.s32 0, %v306
      %v308 = vrot.slane %v303, %v307
      %v342 = vunpack.c.l.b16 %v255
      %v343 = vunpack.c.l.b16 %v256
      %v344 = vunpack.c.l.b16 %v257
      %v345 = vunpack.c.l.b16 %v258
      %v346 = vunpack.c.l.b16 %v259
      %v347 = vunpack.c.l.b16 %v260
      %v348 = vunpack.c.l.b16 %v261
      %v349 = vunpack.c.l.b16 %v262
      %v350 = vunpack.c.l.b16 %v263
      %v351 = vunpack.c.l.b16 %v264
      %v352 = vunpack.c.l.b16 %v265
      %v353 = vunpack.c.l.b16 %v266
      %v354 = vunpack.c.l.b16 %v267
      %v355 = vunpack.c.l.b16 %v268
      %v356 = vunpack.c.l.b16 %v269
      %v357 = vunpack.c.l.b16 %v270
      %v358 = vunpack.c.l.b16 %v271
      %v359 = vunpack.c.l.b16 %v272
      %v360 = vunpack.c.l.b16 %v273
      %v361 = vunpack.c.l.b16 %v274
      %v362 = vunpack.c.l.b16 %v275
      %v363 = vunpack.c.l.b16 %v276
      %v364 = vunpack.c.l.b16 %v277
      %v365 = vunpack.c.l.b16 %v278
      %v366 = vunpack.c.l.b16 %v279
      %v367 = vunpack.c.l.b16 %v280
      %v368 = vunpack.c.l.b16 %v281
      %v369 = vunpack.c.l.b16 %v282
      %v370 = vunpack.c.l.b16 %v283
      %v371 = vunpack.c.l.b16 %v284
      %v372 = vunpack.c.l.b16 %v285
      %v373 = vunpack.c.l.b16 %v286
      %v374 = vpack.c.b16 %v343, %v342
      %v375 = vpack.c.b16 %v345, %v344
      %v376 = vpack.c.b16 %v347, %v346
      %v377 = vpack.c.b16 %v349, %v348
      %v378 = vpack.c.b16 %v351, %v350
      %v379 = vpack.c.b16 %v353, %v352
      %v380 = vpack.c.b16 %v355, %v354
      %v381 = vpack.c.b16 %v357, %v356
      %v382 = vpack.c.b16 %v359, %v358
      %v383 = vpack.c.b16 %v361, %v360
      %v384 = vpack.c.b16 %v363, %v362
      %v385 = vpack.c.b16 %v365, %v364
      %v386 = vpack.c.b16 %v367, %v366
      %v387 = vpack.c.b16 %v369, %v368
      %v388 = vpack.c.b16 %v371, %v370
      %v389 = vpack.c.b16 %v373, %v372
      %v422 = vunpack.c.l.b16 %v287
      %v423 = vunpack.c.l.b16 %v288
      %v424 = vunpack.c.l.b16 %v289
      %v425 = vunpack.c.l.b16 %v290
      %v426 = vunpack.c.l.b16 %v291
      %v427 = vunpack.c.l.b16 %v292
      %v428 = vunpack.c.l.b16 %v293
      %v429 = vunpack.c.l.b16 %v294
      %v430 = vunpack.c.l.b16 %v295
      %v431 = vunpack.c.l.b16 %v296
      %v432 = vunpack.c.l.b16 %v297
      %v433 = vunpack.c.l.b16 %v298
      %v434 = vunpack.c.l.b16 %v299
      %v435 = vunpack.c.l.b16 %v300
      %v436 = vunpack.c.l.b16 %v301
      %v437 = vunpack.c.l.b16 %v302
      %v438 = vpack.c.b16 %v423, %v422
      %v439 = vpack.c.b16 %v425, %v424
      %v440 = vpack.c.b16 %v427, %v426
      %v441 = vpack.c.b16 %v429, %v428
      %v442 = vpack.c.b16 %v431, %v430
      %v443 = vpack.c.b16 %v433, %v432
      %v444 = vpack.c.b16 %v435, %v434
      %v445 = vpack.c.b16 %v437, %v436
      %454 = vmatprep.subr.bf16.mxu0 0
      %455 = vmatpush1.bf16.msra.mxu0 %v438
      %456 = vmatprep.subr.bf16.mxu0 0
      %457 = vmatpush1.bf16.msra.mxu0 %v439
      %458 = vmatprep.subr.bf16.mxu0 0
      %459 = vmatpush1.bf16.msra.mxu0 %v440
      %460 = vmatprep.subr.bf16.mxu0 0
      %461 = vmatpush1.bf16.msra.mxu0 %v441
      %462 = vmatprep.subr.bf16.mxu0 0
      %463 = vmatpush1.bf16.msra.mxu0 %v442
      %464 = vmatprep.subr.bf16.mxu0 0
      %465 = vmatpush1.bf16.msra.mxu0 %v443
      %466 = vmatprep.subr.bf16.mxu0 0
      %467 = vmatpush1.bf16.msra.mxu0 %v444
      %468 = vmatprep.subr.bf16.mxu0 0
      %469 = vmatpush1.bf16.msra.mxu0 %v445
      %470 = vmatprep.subr.bf16.mxu0 0
      %471 = vmatpush1.bf16.msra.mxu0 0
      %472 = vmatprep.subr.bf16.mxu0 0
      %473 = vmatpush1.bf16.msra.mxu0 0
      %474 = vmatprep.subr.bf16.mxu0 0
      %475 = vmatpush1.bf16.msra.mxu0 0
      %476 = vmatprep.subr.bf16.mxu0 0
      %477 = vmatpush1.bf16.msra.mxu0 0
      %478 = vmatprep.subr.bf16.mxu0 0
      %479 = vmatpush1.bf16.msra.mxu0 0
      %480 = vmatprep.subr.bf16.mxu0 0
      %481 = vmatpush1.bf16.msra.mxu0 0
      %482 = vmatprep.subr.bf16.mxu0 0
      %483 = vmatpush1.bf16.msra.mxu0 0
      %484 = vmatprep.subr.bf16.mxu0 0
      %485 = vmatpush1.bf16.msra.mxu0 0
      %486 = vmatprep.mubr.bf16.mxu0 0
      %487 = vmatmul.mubr.bf16.gmra.mrb[0].mxu0 %v374
      %v488 = vpop.f32.mrb[0].mxu0
      %v489 = vadd.f32 %v308, %v488
      %v490 = vpop.f32.mrb[0].mxu0
      %v491 = vpop.f32.mrb[0].mxu0
      %v492 = vadd.f32 %v308, %v491
      %v493 = vpop.f32.mrb[0].mxu0
      %494 = vmatprep.mubr.bf16.mxu0 0
      %495 = vmatmul.mubr.bf16.gmra.mrb[0].mxu0 %v375
      %v496 = vpop.f32.mrb[0].mxu0
      %v497 = vadd.f32 %v308, %v496
      %v498 = vpop.f32.mrb[0].mxu0
      %v499 = vpop.f32.mrb[0].mxu0
      %v500 = vadd.f32 %v308, %v499
      %v501 = vpop.f32.mrb[0].mxu0
      %502 = vmatprep.mubr.bf16.mxu0 0
      %503 = vmatmul.mubr.bf16.gmra.mrb[0].mxu0 %v376
      %v504 = vpop.f32.mrb[0].mxu0
      %v505 = vadd.f32 %v308, %v504
      %v506 = vpop.f32.mrb[0].mxu0
      %v507 = vpop.f32.mrb[0].mxu0
      %v508 = vadd.f32 %v308, %v507
      %v509 = vpop.f32.mrb[0].mxu0
      %510 = vmatprep.mubr.bf16.mxu0 0
      %511 = vmatmul.mubr.bf16.gmra.mrb[0].mxu0 %v377
      %v512 = vpop.f32.mrb[0].mxu0
      %v513 = vadd.f32 %v308, %v512
      %v514 = vpop.f32.mrb[0].mxu0
      %v515 = vpop.f32.mrb[0].mxu0
      %v516 = vadd.f32 %v308, %v515
      %v517 = vpop.f32.mrb[0].mxu0
      %518 = vmatprep.mubr.bf16.mxu0 0
      %519 = vmatmul.mubr.bf16.gmra.mrb[0].mxu0 %v378
      %v520 = vpop.f32.mrb[0].mxu0
      %v521 = vadd.f32 %v308, %v520
      %v522 = vpop.f32.mrb[0].mxu0
      %v523 = vpop.f32.mrb[0].mxu0
      %v524 = vadd.f32 %v308, %v523
      %v525 = vpop.f32.mrb[0].mxu0
      %526 = vmatprep.mubr.bf16.mxu0 0
      %527 = vmatmul.mubr.bf16.gmra.mrb[0].mxu0 %v379
      %v528 = vpop.f32.mrb[0].mxu0
      %v529 = vadd.f32 %v308, %v528
      %v530 = vpop.f32.mrb[0].mxu0
      %v531 = vpop.f32.mrb[0].mxu0
      %v532 = vadd.f32 %v308, %v531
      %v533 = vpop.f32.mrb[0].mxu0
      %534 = vmatprep.mubr.bf16.mxu0 0
      %535 = vmatmul.mubr.bf16.gmra.mrb[0].mxu0 %v380
      %v536 = vpop.f32.mrb[0].mxu0
      %v537 = vadd.f32 %v308, %v536
      %v538 = vpop.f32.mrb[0].mxu0
      %v539 = vpop.f32.mrb[0].mxu0
      %v540 = vadd.f32 %v308, %v539
      %v541 = vpop.f32.mrb[0].mxu0
      %542 = vmatprep.mubr.bf16.mxu0 0
      %543 = vmatmul.mubr.bf16.gmra.mrb[0].mxu0 %v381
      %v544 = vpop.f32.mrb[0].mxu0
      %v545 = vadd.f32 %v308, %v544
      %v546 = vpop.f32.mrb[0].mxu0
      %v547 = vpop.f32.mrb[0].mxu0
      %v548 = vadd.f32 %v308, %v547
      %v549 = vpop.f32.mrb[0].mxu0
      %550 = vmatprep.mubr.bf16.mxu0 0
      %551 = vmatmul.mubr.bf16.gmra.mrb[0].mxu0 %v382
      %v552 = vpop.f32.mrb[0].mxu0
      %v553 = vadd.f32 %v308, %v552
      %v554 = vpop.f32.mrb[0].mxu0
      %v555 = vpop.f32.mrb[0].mxu0
      %v556 = vadd.f32 %v308, %v555
      %v557 = vpop.f32.mrb[0].mxu0
      %558 = vmatprep.mubr.bf16.mxu0 0
      %559 = vmatmul.mubr.bf16.gmra.mrb[0].mxu0 %v383
      %v560 = vpop.f32.mrb[0].mxu0
      %v561 = vadd.f32 %v308, %v560
      %v562 = vpop.f32.mrb[0].mxu0
      %v563 = vpop.f32.mrb[0].mxu0
      %v564 = vadd.f32 %v308, %v563
      %v565 = vpop.f32.mrb[0].mxu0
      %566 = vmatprep.mubr.bf16.mxu0 0
      %567 = vmatmul.mubr.bf16.gmra.mrb[0].mxu0 %v384
      %v568 = vpop.f32.mrb[0].mxu0
      %v569 = vadd.f32 %v308, %v568
      %v570 = vpop.f32.mrb[0].mxu0
      %v571 = vpop.f32.mrb[0].mxu0
      %v572 = vadd.f32 %v308, %v571
      %v573 = vpop.f32.mrb[0].mxu0
      %574 = vmatprep.mubr.bf16.mxu0 0
      %575 = vmatmul.mubr.bf16.gmra.mrb[0].mxu0 %v385
      %v576 = vpop.f32.mrb[0].mxu0
      %v577 = vadd.f32 %v308, %v576
      %v578 = vpop.f32.mrb[0].mxu0
      %v579 = vpop.f32.mrb[0].mxu0
      %v580 = vadd.f32 %v308, %v579
      %v581 = vpop.f32.mrb[0].mxu0
      %582 = vmatprep.mubr.bf16.mxu0 0
      %583 = vmatmul.mubr.bf16.gmra.mrb[0].mxu0 %v386
      %v584 = vpop.f32.mrb[0].mxu0
      %v585 = vadd.f32 %v308, %v584
      %v586 = vpop.f32.mrb[0].mxu0
      %v587 = vpop.f32.mrb[0].mxu0
      %v588 = vadd.f32 %v308, %v587
      %v589 = vpop.f32.mrb[0].mxu0
      %590 = vmatprep.mubr.bf16.mxu0 0
      %591 = vmatmul.mubr.bf16.gmra.mrb[0].mxu0 %v387
      %v592 = vpop.f32.mrb[0].mxu0
      %v593 = vadd.f32 %v308, %v592
      %v594 = vpop.f32.mrb[0].mxu0
      %v595 = vpop.f32.mrb[0].mxu0
      %v596 = vadd.f32 %v308, %v595
      %v597 = vpop.f32.mrb[0].mxu0
      %598 = vmatprep.mubr.bf16.mxu0 0
      %599 = vmatmul.mubr.bf16.gmra.mrb[0].mxu0 %v388
      %v600 = vpop.f32.mrb[0].mxu0
      %v601 = vadd.f32 %v308, %v600
      %v602 = vpop.f32.mrb[0].mxu0
      %v603 = vpop.f32.mrb[0].mxu0
      %v604 = vadd.f32 %v308, %v603
      %v605 = vpop.f32.mrb[0].mxu0
      %606 = vmatprep.mubr.bf16.mxu0 0
      %607 = vmatmul.mubr.bf16.gmra.mrb[0].mxu0 %v389
      %v608 = vpop.f32.mrb[0].mxu0
      %v609 = vadd.f32 %v308, %v608
      %v610 = vpop.f32.mrb[0].mxu0
      %v611 = vpop.f32.mrb[0].mxu0
      %v612 = vadd.f32 %v308, %v611
      %v613 = vpop.f32.mrb[0].mxu0
      %614 = vdwg.mxu0
      %v615 = vmax.f32 %v489, 0.0
      %v616 = vmax.f32 %v492, 0.0
      %v617 = vmax.f32 %v497, 0.0
      %v618 = vmax.f32 %v500, 0.0
      %v619 = vmax.f32 %v505, 0.0
      %v620 = vmax.f32 %v508, 0.0
      %v621 = vmax.f32 %v513, 0.0
      %v622 = vmax.f32 %v516, 0.0
      %v623 = vmax.f32 %v521, 0.0
      %v624 = vmax.f32 %v524, 0.0
      %v625 = vmax.f32 %v529, 0.0
      %v626 = vmax.f32 %v532, 0.0
      %v627 = vmax.f32 %v537, 0.0
      %v628 = vmax.f32 %v540, 0.0
      %v629 = vmax.f32 %v545, 0.0
      %v630 = vmax.f32 %v548, 0.0
      %v631 = vmax.f32 %v553, 0.0
      %v632 = vmax.f32 %v556, 0.0
      %v633 = vmax.f32 %v561, 0.0
      %v634 = vmax.f32 %v564, 0.0
      %v635 = vmax.f32 %v569, 0.0
      %v636 = vmax.f32 %v572, 0.0
      %v637 = vmax.f32 %v577, 0.0
      %v638 = vmax.f32 %v580, 0.0
      %v639 = vmax.f32 %v585, 0.0
      %v640 = vmax.f32 %v588, 0.0
      %v641 = vmax.f32 %v593, 0.0
      %v642 = vmax.f32 %v596, 0.0
      %v643 = vmax.f32 %v601, 0.0
      %v644 = vmax.f32 %v604, 0.0
      %v645 = vmax.f32 %v609, 0.0
      %v646 = vmax.f32 %v612, 0.0
      %s647 = smul.u32 %s21, 256
      %v648 = vlaneseq
      %v649 = vshrl.u32 %v648, 7
      %v650 = vadd.s32 %v649, 8
      %v651 = vadd.s32 %v649, 16
      %v652 = vadd.s32 %v649, 24
      %v653 = vadd.s32 %v649, 32
      %v654 = vadd.s32 %v649, 40
      %v655 = vadd.s32 %v649, 48
      %v656 = vadd.s32 %v649, 56
      %v657 = vadd.s32 %v649, 64
      %v658 = vadd.s32 %v649, 72
      %v659 = vadd.s32 %v649, 80
      %v660 = vadd.s32 %v649, 88
      %v661 = vadd.s32 %v649, 96
      %v662 = vadd.s32 %v649, 104
      %v663 = vadd.s32 %v649, 112
      %v664 = vadd.s32 %v649, 120
      %v665 = vadd.s32 %v649, 128
      %v666 = vadd.s32 %v649, 136
      %v667 = vadd.s32 %v649, 144
      %v668 = vadd.s32 %v649, 152
      %v669 = vadd.s32 %v649, 160
      %v670 = vadd.s32 %v649, 168
      %v671 = vadd.s32 %v649, 176
      %v672 = vadd.s32 %v649, 184
      %v673 = vadd.s32 %v649, 192
      %v674 = vadd.s32 %v649, 200
      %v675 = vadd.s32 %v649, 208
      %v676 = vadd.s32 %v649, 216
      %v677 = vadd.s32 %v649, 224
      %v678 = vadd.s32 %v649, 232
      %v679 = vadd.s32 %v649, 240
      %v680 = vadd.s32 %v649, 248
      %v681 = vstv %s647
      %v682 = vadd.s32 %v681, %v649
      %v683 = vadd.s32 %v681, %v650
      %v684 = vadd.s32 %v681, %v651
      %v685 = vadd.s32 %v681, %v652
      %v686 = vadd.s32 %v681, %v653
      %v687 = vadd.s32 %v681, %v654
      %v688 = vadd.s32 %v681, %v655
      %v689 = vadd.s32 %v681, %v656
      %v690 = vadd.s32 %v681, %v657
      %v691 = vadd.s32 %v681, %v658
      %v692 = vadd.s32 %v681, %v659
      %v693 = vadd.s32 %v681, %v660
      %v694 = vadd.s32 %v681, %v661
      %v695 = vadd.s32 %v681, %v662
      %v696 = vadd.s32 %v681, %v663
      %v697 = vadd.s32 %v681, %v664
      %v698 = vadd.s32 %v681, %v665
      %v699 = vadd.s32 %v681, %v666
      %v700 = vadd.s32 %v681, %v667
      %v701 = vadd.s32 %v681, %v668
      %v702 = vadd.s32 %v681, %v669
      %v703 = vadd.s32 %v681, %v670
      %v704 = vadd.s32 %v681, %v671
      %v705 = vadd.s32 %v681, %v672
      %v706 = vadd.s32 %v681, %v673
      %v707 = vadd.s32 %v681, %v674
      %v708 = vadd.s32 %v681, %v675
      %v709 = vadd.s32 %v681, %v676
      %v710 = vadd.s32 %v681, %v677
      %v711 = vadd.s32 %v681, %v678
      %v712 = vadd.s32 %v681, %v679
      %v713 = vadd.s32 %v681, %v680
      %vm714 = vcmp.lt.s32.totalorder %v682, 256
      %vm715 = vcmp.lt.s32.totalorder %v683, 256
      %vm716 = vcmp.lt.s32.totalorder %v684, 256
      %vm717 = vcmp.lt.s32.totalorder %v685, 256
      %vm718 = vcmp.lt.s32.totalorder %v686, 256
      %vm719 = vcmp.lt.s32.totalorder %v687, 256
      %vm720 = vcmp.lt.s32.totalorder %v688, 256
      %vm721 = vcmp.lt.s32.totalorder %v689, 256
      %vm722 = vcmp.lt.s32.totalorder %v690, 256
      %vm723 = vcmp.lt.s32.totalorder %v691, 256
      %vm724 = vcmp.lt.s32.totalorder %v692, 256
      %vm725 = vcmp.lt.s32.totalorder %v693, 256
      %vm726 = vcmp.lt.s32.totalorder %v694, 256
      %vm727 = vcmp.lt.s32.totalorder %v695, 256
      %vm728 = vcmp.lt.s32.totalorder %v696, 256
      %vm729 = vcmp.lt.s32.totalorder %v697, 256
      %vm730 = vcmp.lt.s32.totalorder %v698, 256
      %vm731 = vcmp.lt.s32.totalorder %v699, 256
      %vm732 = vcmp.lt.s32.totalorder %v700, 256
      %vm733 = vcmp.lt.s32.totalorder %v701, 256
      %vm734 = vcmp.lt.s32.totalorder %v702, 256
      %vm735 = vcmp.lt.s32.totalorder %v703, 256
      %vm736 = vcmp.lt.s32.totalorder %v704, 256
      %vm737 = vcmp.lt.s32.totalorder %v705, 256
      %vm738 = vcmp.lt.s32.totalorder %v706, 256
      %vm739 = vcmp.lt.s32.totalorder %v707, 256
      %vm740 = vcmp.lt.s32.totalorder %v708, 256
      %vm741 = vcmp.lt.s32.totalorder %v709, 256
      %vm742 = vcmp.lt.s32.totalorder %v710, 256
      %vm743 = vcmp.lt.s32.totalorder %v711, 256
      %vm744 = vcmp.lt.s32.totalorder %v712, 256
      %vm745 = vcmp.lt.s32.totalorder %v713, 256
      %v746 = vsel %vm714, %v615, 0.0
      %v747 = vsel %vm715, %v616, 0.0
      %v748 = vsel %vm716, %v617, 0.0
      %v749 = vsel %vm717, %v618, 0.0
      %v750 = vsel %vm718, %v619, 0.0
      %v751 = vsel %vm719, %v620, 0.0
      %v752 = vsel %vm720, %v621, 0.0
      %v753 = vsel %vm721, %v622, 0.0
      %v754 = vsel %vm722, %v623, 0.0
      %v755 = vsel %vm723, %v624, 0.0
      %v756 = vsel %vm724, %v625, 0.0
      %v757 = vsel %vm725, %v626, 0.0
      %v758 = vsel %vm726, %v627, 0.0
      %v759 = vsel %vm727, %v628, 0.0
      %v760 = vsel %vm728, %v629, 0.0
      %v761 = vsel %vm729, %v630, 0.0
      %v762 = vsel %vm730, %v631, 0.0
      %v763 = vsel %vm731, %v632, 0.0
      %v764 = vsel %vm732, %v633, 0.0
      %v765 = vsel %vm733, %v634, 0.0
      %v766 = vsel %vm734, %v635, 0.0
      %v767 = vsel %vm735, %v636, 0.0
      %v768 = vsel %vm736, %v637, 0.0
      %v769 = vsel %vm737, %v638, 0.0
      %v770 = vsel %vm738, %v639, 0.0
      %v771 = vsel %vm739, %v640, 0.0
      %v772 = vsel %vm740, %v641, 0.0
      %v773 = vsel %vm741, %v642, 0.0
      %v774 = vsel %vm742, %v643, 0.0
      %v775 = vsel %vm743, %v644, 0.0
      %v776 = vsel %vm744, %v645, 0.0
      %v777 = vsel %vm745, %v646, 0.0
      %v778 = vld [vmem:[#allocation2] sm:$0x1]
      %v779 = vadd.f32 %v746, %v747
      %v780 = vadd.f32 %v779, %v748
      %v781 = vadd.f32 %v780, %v749
      %v782 = vadd.f32 %v781, %v750
      %v783 = vadd.f32 %v782, %v751
      %v784 = vadd.f32 %v783, %v752
      %v785 = vadd.f32 %v784, %v753
      %v786 = vadd.f32 %v785, %v754
      %v787 = vadd.f32 %v786, %v755
      %v788 = vadd.f32 %v787, %v756
      %v789 = vadd.f32 %v788, %v757
      %v790 = vadd.f32 %v789, %v758
      %v791 = vadd.f32 %v790, %v759
      %v792 = vadd.f32 %v791, %v760
      %v793 = vadd.f32 %v792, %v761
      %v794 = vadd.f32 %v793, %v762
      %v795 = vadd.f32 %v794, %v763
      %v796 = vadd.f32 %v795, %v764
      %v797 = vadd.f32 %v796, %v765
      %v798 = vadd.f32 %v797, %v766
      %v799 = vadd.f32 %v798, %v767
      %v800 = vadd.f32 %v799, %v768
      %v801 = vadd.f32 %v800, %v769
      %v802 = vadd.f32 %v801, %v770
      %v803 = vadd.f32 %v802, %v771
      %v804 = vadd.f32 %v803, %v772
      %v805 = vadd.f32 %v804, %v773
      %v806 = vadd.f32 %v805, %v774
      %v807 = vadd.f32 %v806, %v775
      %v808 = vadd.f32 %v807, %v776
      %v809 = vadd.f32 %v808, %v777
      %v810 = vrot.slane %v809, 4
      %v811 = vadd.f32 %v809, %v810
      %v812 = vrot.slane %v811, 2
      %v813 = vadd.f32 %v811, %v812
      %v814 = vrot.slane %v813, 1
      %v815 = vadd.f32 %v813, %v814
      %v816 = vadd.f32 %v778, %v815
      %817 = vst [vmem:[#allocation2] sm:$0x1] %v816
      // Predicated region
      $region45: #{a_call__.2} parent=39 // pred_check
        %p818 = pneg %p250
      $region46: #{a_call__.2} parent=39 // pred_check_branch
        %820 = sbr.rel (%p818) target = $region48
      $region47: #{a_call__.2} parent=39 // pred_region
        %v821 = vld [vmem:[#allocation2] sm:$0x1]
        %v822 = vmul.f32 %v821, 0.00390625
        %v823 = vpack.c.bf16 %v822, %v822
        %v824 = vld [vmem:[%s3] sm:$0xf]
        %v825 = vld [vmem:[%s3 + $0x4] sm:$0xf]
        %v826 = vld [vmem:[%s3 + $0x8] sm:$0xf]
        %v827 = vld [vmem:[%s3 + $0xc] sm:$0xf]
        %v828 = vld [vmem:[%s3 + $0x10] sm:$0xf]
        %v829 = vld [vmem:[%s3 + $0x14] sm:$0xf]
        %v830 = vld [vmem:[%s3 + $0x18] sm:$0xf]
        %v831 = vld [vmem:[%s3 + $0x1c] sm:$0xf]
        %v832 = vld [vmem:[%s3 + $0x20] sm:$0xf]
        %v833 = vld [vmem:[%s3 + $0x24] sm:$0xf]
        %v834 = vld [vmem:[%s3 + $0x28] sm:$0xf]
        %v835 = vld [vmem:[%s3 + $0x2c] sm:$0xf]
        %v836 = vld [vmem:[%s3 + $0x30] sm:$0xf]
        %v837 = vld [vmem:[%s3 + $0x34] sm:$0xf]
        %v838 = vld [vmem:[%s3 + $0x38] sm:$0xf]
        %v839 = vld [vmem:[%s3 + $0x3c] sm:$0xf]
        %v840 = vld [vmem:[%s4] sm:$0x1]
        %v857 = vunpack.c.l.b16 %v824
        %v858 = vunpack.c.l.b16 %v825
        %v859 = vunpack.c.l.b16 %v826
        %v860 = vunpack.c.l.b16 %v827
        %v861 = vunpack.c.l.b16 %v828
        %v862 = vunpack.c.l.b16 %v829
        %v863 = vunpack.c.l.b16 %v830
        %v864 = vunpack.c.l.b16 %v831
        %v865 = vunpack.c.l.b16 %v832
        %v866 = vunpack.c.l.b16 %v833
        %v867 = vunpack.c.l.b16 %v834
        %v868 = vunpack.c.l.b16 %v835
        %v869 = vunpack.c.l.b16 %v836
        %v870 = vunpack.c.l.b16 %v837
        %v871 = vunpack.c.l.b16 %v838
        %v872 = vunpack.c.l.b16 %v839
        %v873 = vpack.c.b16 %v858, %v857
        %v874 = vpack.c.b16 %v860, %v859
        %v875 = vpack.c.b16 %v862, %v861
        %v876 = vpack.c.b16 %v864, %v863
        %v877 = vpack.c.b16 %v866, %v865
        %v878 = vpack.c.b16 %v868, %v867
        %v879 = vpack.c.b16 %v870, %v869
        %v880 = vpack.c.b16 %v872, %v871
        %889 = vmatprep.subr.bf16.mxu0 0
        %890 = vmatpush1.bf16.msra.mxu0 %v873
        %891 = vmatprep.subr.bf16.mxu0 0
        %892 = vmatpush1.bf16.msra.mxu0 %v874
        %893 = vmatprep.subr.bf16.mxu0 0
        %894 = vmatpush1.bf16.msra.mxu0 %v875
        %895 = vmatprep.subr.bf16.mxu0 0
        %896 = vmatpush1.bf16.msra.mxu0 %v876
        %897 = vmatprep.subr.bf16.mxu0 0
        %898 = vmatpush1.bf16.msra.mxu0 %v877
        %899 = vmatprep.subr.bf16.mxu0 0
        %900 = vmatpush1.bf16.msra.mxu0 %v878
        %901 = vmatprep.subr.bf16.mxu0 0
        %902 = vmatpush1.bf16.msra.mxu0 %v879
        %903 = vmatprep.subr.bf16.mxu0 0
        %904 = vmatpush1.bf16.msra.mxu0 %v880
        %905 = vmatprep.subr.bf16.mxu0 0
        %906 = vmatpush1.bf16.msra.mxu0 0
        %907 = vmatprep.subr.bf16.mxu0 0
        %908 = vmatpush1.bf16.msra.mxu0 0
        %909 = vmatprep.subr.bf16.mxu0 0
        %910 = vmatpush1.bf16.msra.mxu0 0
        %911 = vmatprep.subr.bf16.mxu0 0
        %912 = vmatpush1.bf16.msra.mxu0 0
        %913 = vmatprep.subr.bf16.mxu0 0
        %914 = vmatpush1.bf16.msra.mxu0 0
        %915 = vmatprep.subr.bf16.mxu0 0
        %916 = vmatpush1.bf16.msra.mxu0 0
        %917 = vmatprep.subr.bf16.mxu0 0
        %918 = vmatpush1.bf16.msra.mxu0 0
        %919 = vmatprep.subr.bf16.mxu0 0
        %920 = vmatpush1.bf16.msra.mxu0 0
        %921 = vmatprep.mubr.bf16.mxu0 0
        %922 = vmatmul.mubr.bf16.gmra.mrb[0].mxu0 %v823
        %v923 = vpop.f32.mrb[0].mxu0
        %v924 = vadd.f32 %v840, %v923
        %v925 = vpop.f32.mrb[0].mxu0
        %v926 = vpop.f32.mrb[0].mxu0
        %v927 = vpop.f32.mrb[0].mxu0
        %928 = vdwg.mxu0
        %929 = vst [vmem:[%s248] sm:$0x1] %v924
      $region48: #{a_call__.2} parent=39 // pred_fallthru
        _
      %p930 = scmp.lt.s32.totalorder %s20, 1
      %s931 = scalar_select %p930, %s20, 1
      %s932 = scalar_lea.vmem %s5, %s931
      // Predicated region
      $region49: #{a_call__.2} parent=39 // pred_check
        %p933 = pneg %p158
      $region50: #{a_call__.2} parent=39 // pred_check_branch
        %935 = sbr.rel (%p933) target = $region52
      $region51: #{a_call__.2} parent=39 // pred_region
        _
      $region52: #{a_call__.2} parent=39 // pred_fallthru
        _
    $region40: #{a_call__.2} parent=5 // pred_fallthru
      _
    %p936 = scmp.le.s32.totalorder 2, %s11
    // Predicated region
    $region53: #{a_call__.2} parent=5 // pred_check
      %p937 = pneg %p936
    $region54: #{a_call__.2} parent=5 // pred_check_branch
      %939 = sbr.rel (%p937) target = $region56
    $region55: #{a_call__.2} parent=5 // pred_region
      %s940 = ssub.s32 %s11, 2
      // Predicated region
      $region57: #{a_call__.2} parent=55 // pred_check
        %p941 = pneg %p164
      $region58: #{a_call__.2} parent=55 // pred_check_branch
        %943 = sbr.rel (%p941) target = $region60
      $region59: #{a_call__.2} parent=55 // pred_region
        %p944 = scmp.lt.s32.totalorder %s22, 1
        %s945 = scalar_select %p944, %s22, 1
        %s946 = scalar_lea.vmem %s5, %s945
      $region60: #{a_call__.2} parent=55 // pred_fallthru
        _
    $region56: #{a_call__.2} parent=5 // pred_fallthru
      _
  $region6: #{a_call__.2} parent=0 // loop_footer
    %s15 = sadd.s32 1, %s11
  $region7: #{a_call__.2} parent=0 // loop_footer_branch
    %10 = sbr.rel target = $region3
  $region8: #{a_call__.2} parent=0 // loop_exit
    _

</llo_original>
